<compile_context>
chip_gen: v6e
topology: v6e:2x2x1
jax: 0.10.0
libtpu: 0.0.40
codegen_flags: <defaults>
</compile_context>

<pallas_src>
import jax
import jax.numpy as jnp
from jax.experimental import pallas as pl
from jax.experimental.pallas import tpu as pltpu

HIDDEN = 512
OUT_DIM = 784


def _round_up(x, m):
    return (x + m - 1) // m * m


def _tile_batch(B, max_tm=1024):
    """Pick (tm, b_pad): batch tile size (multiple of 8/16) and padded batch.

    Prefers >=2 grid steps (megacore sharding on v7x + x/out pipelining), then
    minimal padding waste, then larger tiles (per-step overhead amortization).
    """
    b8 = _round_up(B, 8)
    if b8 <= 128:
        return b8, b8                      # single full-dim tile, grid=(1,)
    cands = {c for c in (128, 256, 512, 1024) if c <= max_tm}
    for k in (2, 4, 8):                    # balanced splits for awkward batch sizes
        cands.add(min(max_tm, _round_up(pl.cdiv(b8, k), 16)))
    best = None
    for tm in cands:
        tm = min(tm, b8)
        b_pad = _round_up(b8, tm)
        steps = b_pad // tm
        key = (0 if steps >= 2 else 1, b_pad - B, -tm)
        if best is None or key < best[1]:
            best = ((tm, b_pad), key)
    return best[0]


def _decoder_kernel(x_ref, w1_ref, b1_ref, w2_ref, b2_ref, w3_ref, b3_ref, o_ref):
    # layer 1: Linear(z_dim -> 512) + ReLU   (bf16 MXU operands, f32 accumulate)
    h = jnp.dot(x_ref[...], w1_ref[...], preferred_element_type=jnp.float32)
    h = jnp.maximum(h + b1_ref[...], 0.0)          # epilogue in f32 (v5e has no bf16 VPU)
    # layer 2: Linear(512 -> 512) + ReLU
    h = jnp.dot(h.astype(jnp.bfloat16), w2_ref[...], preferred_element_type=jnp.float32)
    h = jnp.maximum(h + b2_ref[...], 0.0)
    # layer 3: Linear(512 -> 784), logits; store bf16 (halves output writeback)
    logits = jnp.dot(h.astype(jnp.bfloat16), w3_ref[...], preferred_element_type=jnp.float32)
    o_ref[...] = (logits + b3_ref[...]).astype(o_ref.dtype)


def image_decoder_forward(x, params, *, max_tm=1024, out_dtype=jnp.bfloat16):
    """x: (B, z_dim) float32/bf16. params: bf16 weights (in,out), f32 biases (1,out)."""
    B, z_dim = x.shape
    out_dim = params["w3"].shape[1]        # 784

    tm, b_pad = _tile_batch(B, max_tm)
    xb = x.astype(jnp.bfloat16)
    if b_pad != B:
        xb = jnp.pad(xb, ((0, b_pad - B), (0, 0)))
    grid = (b_pad // tm,)

    def const_spec(a):  # grid-invariant: weights/biases stay resident in VMEM
        return pl.BlockSpec(a.shape, lambda i: (0, 0))

    flops = 2 * b_pad * (z_dim * HIDDEN + HIDDEN * HIDDEN + HIDDEN * out_dim)
    bytes_accessed = (
        xb.size * xb.dtype.itemsize
        + sum(v.size * v.dtype.itemsize for v in params.values())
        + b_pad * out_dim * jnp.dtype(out_dtype).itemsize
    )

    out = pl.pallas_call(
        _decoder_kernel,
        out_shape=jax.ShapeDtypeStruct((b_pad, out_dim), out_dtype),
        grid=grid,
        in_specs=[
            pl.BlockSpec((tm, z_dim), lambda i: (i, 0)),
            const_spec(params["w1"]), const_spec(params["b1"]),
            const_spec(params["w2"]), const_spec(params["b2"]),
            const_spec(params["w3"]), const_spec(params["b3"]),
        ],
        out_specs=pl.BlockSpec((tm, out_dim), lambda i: (i, 0)),
        compiler_params=pltpu.CompilerParams(
            dimension_semantics=("parallel",),   # shard batch tiles across v7x's 2 TCs
            vmem_limit_bytes=40 << 20,           # headroom for tm=1024 tiles; << 64 MiB
        ),
        cost_estimate=pl.CostEstimate(
            flops=flops, transcendentals=0, bytes_accessed=bytes_accessed),
    )(
        xb,
        params["w1"], params["b1"],
        params["w2"], params["b2"],
        params["w3"], params["b3"],
    )
    if b_pad != B:                          # only copies when batch padding was needed
        out = out[:B]
    return out


def init_params(key, z_dim, hidden=HIDDEN, out_dim=OUT_DIM):
    """PyTorch-Linear-style init (uniform +/- 1/sqrt(fan_in)).

    Returns (kernel_params, ref_params):
      kernel_params: bf16 weights stored (in, out); f32 biases shaped (1, out).
      ref_params:    unpadded f32 copies for the pure-JAX reference.
    """
    ks = jax.random.split(key, 6)

    def lin(kw, kb, fan_in, fan_out):
        bound = 1.0 / jnp.sqrt(jnp.float32(fan_in))
        w = jax.random.uniform(kw, (fan_in, fan_out), jnp.float32, -bound, bound)
        b = jax.random.uniform(kb, (1, fan_out), jnp.float32, -bound, bound)
        return w, b

    w1, b1 = lin(ks[0], ks[1], z_dim, hidden)
    w2, b2 = lin(ks[2], ks[3], hidden, hidden)
    w3, b3 = lin(ks[4], ks[5], hidden, out_dim)

    ref = {"w1": w1, "b1": b1, "w2": w2, "b2": b2, "w3": w3, "b3": b3}
    kparams = {
        "w1": w1.astype(jnp.bfloat16), "b1": b1,
        "w2": w2.astype(jnp.bfloat16), "b2": b2,
        "w3": w3.astype(jnp.bfloat16), "b3": b3,
    }
    return kparams, ref


def _reference_f32(x, p):
    h = jnp.maximum(x @ p["w1"] + p["b1"], 0.0)
    h = jnp.maximum(h @ p["w2"] + p["b2"], 0.0)
    return h @ p["w3"] + p["b3"]


def _reference_bf16(x, p):
    # Mirrors the kernel's bf16-operand / f32-accumulate / bf16-output arithmetic.
    h = jnp.dot(x.astype(jnp.bfloat16), p["w1"], preferred_element_type=jnp.float32)
    h = jnp.maximum(h + p["b1"], 0.0)
    h = jnp.dot(h.astype(jnp.bfloat16), p["w2"], preferred_element_type=jnp.float32)
    h = jnp.maximum(h + p["b2"], 0.0)
    logits = jnp.dot(h.astype(jnp.bfloat16), p["w3"], preferred_element_type=jnp.float32)
    return (logits + p["b3"]).astype(jnp.bfloat16)


if __name__ == "__main__":
    key = jax.random.PRNGKey(0)
    k_params, k_x = jax.random.split(key)

    B, Z_DIM = 8, 32
    kparams, ref_params = init_params(k_params, Z_DIM)
    x = jax.random.normal(k_x, (B, Z_DIM), jnp.float32)

    out = image_decoder_forward(x, kparams)
    out = jax.block_until_ready(out)
    assert out.shape == (B, OUT_DIM), out.shape
    assert out.dtype == jnp.bfloat16, out.dtype

    # Tight check vs a bf16-matched reference (same op sequence, same output dtype).
    ref_bf16 = _reference_bf16(x, kparams).astype(jnp.float32)
    assert jnp.allclose(out.astype(jnp.float32), ref_bf16, atol=2e-2, rtol=2e-2), \
        "mismatch vs bf16 reference"

    # Looser check vs the original all-f32 PyTorch semantics (bf16 weight quantization
    # + bf16 output rounding are intentional accuracy trades).
    ref_f32 = _reference_f32(x, ref_params)
    assert jnp.allclose(out.astype(jnp.float32), ref_f32, atol=6e-2, rtol=6e-2), \
        "mismatch vs f32 reference"

    print("KERNEL_OK")
</pallas_src>

<mosaic_0001>
module attributes {stable_mosaic.version = 11 : i64} {
  func.func @_decoder_kernel(%arg0: i32, %arg1: memref<8x32xbf16, #tpu.memory_space<vmem>>, %arg2: memref<32x512xbf16, #tpu.memory_space<vmem>>, %arg3: memref<1x512xf32, #tpu.memory_space<vmem>>, %arg4: memref<512x512xbf16, #tpu.memory_space<vmem>>, %arg5: memref<1x512xf32, #tpu.memory_space<vmem>>, %arg6: memref<512x784xbf16, #tpu.memory_space<vmem>>, %arg7: memref<1x784xf32, #tpu.memory_space<vmem>>, %arg8: memref<8x784xbf16, #tpu.memory_space<vmem>>) attributes {dimension_semantics = [#tpu.dimension_semantics<parallel>], iteration_bounds = array<i64: 1>, scalar_prefetch = 0 : i64, scratch_operands = 0 : i64, tpu.core_type = #tpu.core_type<tc>, window_params = [{transform_indices = @transform_0, window_bounds = array<i64: 8, 32>}, {pipeline_mode = #tpu.pipeline_mode<synchronous>, transform_indices = @transform_1, window_bounds = array<i64: 32, 512>}, {pipeline_mode = #tpu.pipeline_mode<synchronous>, transform_indices = @transform_2, window_bounds = array<i64: 1, 512>}, {pipeline_mode = #tpu.pipeline_mode<synchronous>, transform_indices = @transform_3, window_bounds = array<i64: 512, 512>}, {pipeline_mode = #tpu.pipeline_mode<synchronous>, transform_indices = @transform_4, window_bounds = array<i64: 1, 512>}, {pipeline_mode = #tpu.pipeline_mode<synchronous>, transform_indices = @transform_5, window_bounds = array<i64: 512, 784>}, {pipeline_mode = #tpu.pipeline_mode<synchronous>, transform_indices = @transform_6, window_bounds = array<i64: 1, 784>}, {transform_indices = @transform_7, window_bounds = array<i64: 8, 784>}]} {
    %c0 = arith.constant 0 : index
    %c0_0 = arith.constant 0 : index
    %0 = vector.load %arg1[%c0, %c0_0] : memref<8x32xbf16, #tpu.memory_space<vmem>>, vector<8x32xbf16>
    %c0_1 = arith.constant 0 : index
    %c0_2 = arith.constant 0 : index
    %1 = vector.load %arg2[%c0_1, %c0_2] : memref<32x512xbf16, #tpu.memory_space<vmem>>, vector<32x512xbf16>
    %cst = arith.constant dense<0.000000e+00> : vector<8x512xf32>
    %2 = tpu.matmul %0, %1, %cst {dimension_numbers = #tpu.dot_dimension_numbers<[1], [0], [0], [1], [0, 0, 1, 1], [], []>} : vector<8x32xbf16>, vector<32x512xbf16>, vector<8x512xf32> -> vector<8x512xf32>
    %c0_3 = arith.constant 0 : index
    %c0_4 = arith.constant 0 : index
    %3 = vector.load %arg3[%c0_3, %c0_4] : memref<1x512xf32, #tpu.memory_space<vmem>>, vector<1x512xf32>
    %4 = vector.broadcast %3 : vector<1x512xf32> to vector<8x512xf32>
    %5 = arith.addf %2, %4 : vector<8x512xf32>
    %cst_5 = arith.constant 0.000000e+00 : f32
    %6 = vector.broadcast %cst_5 : f32 to vector<8x512xf32>
    %7 = arith.maximumf %5, %6 : vector<8x512xf32>
    %8 = arith.truncf %7 : vector<8x512xf32> to vector<8x512xbf16>
    %c0_6 = arith.constant 0 : index
    %c0_7 = arith.constant 0 : index
    %9 = vector.load %arg4[%c0_6, %c0_7] : memref<512x512xbf16, #tpu.memory_space<vmem>>, vector<512x512xbf16>
    %cst_8 = arith.constant dense<0.000000e+00> : vector<8x512xf32>
    %10 = tpu.matmul %8, %9, %cst_8 {dimension_numbers = #tpu.dot_dimension_numbers<[1], [0], [0], [1], [0, 0, 1, 1], [], []>} : vector<8x512xbf16>, vector<512x512xbf16>, vector<8x512xf32> -> vector<8x512xf32>
    %c0_9 = arith.constant 0 : index
    %c0_10 = arith.constant 0 : index
    %11 = vector.load %arg5[%c0_9, %c0_10] : memref<1x512xf32, #tpu.memory_space<vmem>>, vector<1x512xf32>
    %12 = vector.broadcast %11 : vector<1x512xf32> to vector<8x512xf32>
    %13 = arith.addf %10, %12 : vector<8x512xf32>
    %cst_11 = arith.constant 0.000000e+00 : f32
    %14 = vector.broadcast %cst_11 : f32 to vector<8x512xf32>
    %15 = arith.maximumf %13, %14 : vector<8x512xf32>
    %16 = arith.truncf %15 : vector<8x512xf32> to vector<8x512xbf16>
    %c0_12 = arith.constant 0 : index
    %c0_13 = arith.constant 0 : index
    %17 = vector.load %arg6[%c0_12, %c0_13] : memref<512x784xbf16, #tpu.memory_space<vmem>>, vector<512x784xbf16>
    %cst_14 = arith.constant dense<0.000000e+00> : vector<8x784xf32>
    %18 = tpu.matmul %16, %17, %cst_14 {dimension_numbers = #tpu.dot_dimension_numbers<[1], [0], [0], [1], [0, 0, 1, 1], [], []>} : vector<8x512xbf16>, vector<512x784xbf16>, vector<8x784xf32> -> vector<8x784xf32>
    %c0_15 = arith.constant 0 : index
    %c0_16 = arith.constant 0 : index
    %19 = vector.load %arg7[%c0_15, %c0_16] : memref<1x784xf32, #tpu.memory_space<vmem>>, vector<1x784xf32>
    %20 = vector.broadcast %19 : vector<1x784xf32> to vector<8x784xf32>
    %21 = arith.addf %18, %20 : vector<8x784xf32>
    %22 = arith.truncf %21 : vector<8x784xf32> to vector<8x784xbf16>
    %c0_17 = arith.constant 0 : index
    %c0_18 = arith.constant 0 : index
    %23 = vector.load %arg8[%c0_17, %c0_18] : memref<8x784xbf16, #tpu.memory_space<vmem>>, vector<8x784xbf16>
    tpu.vector_store %arg8[%c0_17, %c0_18], %22 {strides = array<i32>} : memref<8x784xbf16, #tpu.memory_space<vmem>>, vector<8x784xbf16>,
    return
  }
  func.func @transform_0(%arg0: i32) -> (i32, i32) {
    %c0_i32 = arith.constant 0 : i32
    %c0_i32_0 = arith.constant 0 : i32
    return %arg0, %c0_i32 : i32, i32
  }
  func.func @transform_1(%arg0: i32) -> (i32, i32) {
    %c0_i32 = arith.constant 0 : i32
    %c0_i32_0 = arith.constant 0 : i32
    %c0_i32_1 = arith.constant 0 : i32
    return %c0_i32, %c0_i32_0 : i32, i32
  }
  func.func @transform_2(%arg0: i32) -> (i32, i32) {
    %c0_i32 = arith.constant 0 : i32
    %c0_i32_0 = arith.constant 0 : i32
    %c0_i32_1 = arith.constant 0 : i32
    return %c0_i32, %c0_i32_0 : i32, i32
  }
  func.func @transform_3(%arg0: i32) -> (i32, i32) {
    %c0_i32 = arith.constant 0 : i32
    %c0_i32_0 = arith.constant 0 : i32
    %c0_i32_1 = arith.constant 0 : i32
    return %c0_i32, %c0_i32_0 : i32, i32
  }
  func.func @transform_4(%arg0: i32) -> (i32, i32) {
    %c0_i32 = arith.constant 0 : i32
    %c0_i32_0 = arith.constant 0 : i32
    %c0_i32_1 = arith.constant 0 : i32
    return %c0_i32, %c0_i32_0 : i32, i32
  }
  func.func @transform_5(%arg0: i32) -> (i32, i32) {
    %c0_i32 = arith.constant 0 : i32
    %c0_i32_0 = arith.constant 0 : i32
    %c0_i32_1 = arith.constant 0 : i32
    return %c0_i32, %c0_i32_0 : i32, i32
  }
  func.func @transform_6(%arg0: i32) -> (i32, i32) {
    %c0_i32 = arith.constant 0 : i32
    %c0_i32_0 = arith.constant 0 : i32
    %c0_i32_1 = arith.constant 0 : i32
    return %c0_i32, %c0_i32_0 : i32, i32
  }
  func.func @transform_7(%arg0: i32) -> (i32, i32) {
    %c0_i32 = arith.constant 0 : i32
    %c0_i32_0 = arith.constant 0 : i32
    return %arg0, %c0_i32 : i32, i32
  }
}

</mosaic_0001>

<llo_original>
// kernel: tpu_custom_call.1
$region0: #{tpu_custom_call.1}
  #allocation0 [shape = 'u32[]', space=smem, size = 0x4, offset = 0x4, fixed_abs, tag = 'smem constant byte address 0x4 - core index']
  #allocation1 [shape = 'u32[144,128]{1,0:T(1,128)}', space=vmem, size = 0x12000, scoped, tag = 'internal scratch']
  %s0 = inlined_call_operand.vmem [shape: bf16[8,32], index: 0, kind: input, shape index: {}]
  %s1 = inlined_call_operand.vmem [shape: bf16[32,512], index: 1, kind: input, shape index: {}]
  %s2 = inlined_call_operand.vmem [shape: f32[1,512], index: 2, kind: input, shape index: {}]
  %s3 = inlined_call_operand.vmem [shape: bf16[512,512], index: 3, kind: input, shape index: {}]
  %s4 = inlined_call_operand.vmem [shape: f32[1,512], index: 4, kind: input, shape index: {}]
  %s5 = inlined_call_operand.vmem [shape: bf16[512,784], index: 5, kind: input, shape index: {}]
  %s6 = inlined_call_operand.vmem [shape: f32[1,784], index: 6, kind: input, shape index: {}]
  %s7 = inlined_call_operand.hbm [shape: bf16[8,784], index: 7, kind: output, shape index: {}]
  %s8 = sld [smem:[#allocation0]]
  $region38: #{tpu_custom_call.1} parent=0
    _
  %s10 = ssub.s32 1, %s8
  %s11 = scalar_select 0, %s10, %s8
  $region1: #{tpu_custom_call.1} parent=0
    #allocation2 [shape = 'u8[14336]{0}', space=vmem, size = 0x3800, scoped, tag = 'output window, operand 0, single buffered']
    #allocation3 [shape = 's32[1]{0}', space=sflag, size = 0x4, scoped, tag = 'scoped memory for tpu_custom_call.1']
    %12 = vsyncpa [#allocation3], 0
    // Predicated region
    $region2: #{tpu_custom_call.1} parent=1 // pred_check
      _
    $region3: #{tpu_custom_call.1} parent=1 // pred_check_branch
      %14 = sbr.rel (0) target = $region5
    $region4: #{tpu_custom_call.1} parent=1 // pred_region
      _
    $region5: #{tpu_custom_call.1} parent=1 // pred_fallthru
      _
    // Predicated region
    $region6: #{tpu_custom_call.1} parent=1 // pred_check
      _
    $region7: #{tpu_custom_call.1} parent=1 // pred_check_branch
      %16 = sbr.rel (0) target = $region9
    $region8: #{tpu_custom_call.1} parent=1 // pred_region
      _
    $region9: #{tpu_custom_call.1} parent=1 // pred_fallthru
      _
    // Predicated region
    $region10: #{tpu_custom_call.1} parent=1 // pred_check
      _
    $region11: #{tpu_custom_call.1} parent=1 // pred_check_branch
      %18 = sbr.rel (0) target = $region13
    $region12: #{tpu_custom_call.1} parent=1 // pred_region
      _
    $region13: #{tpu_custom_call.1} parent=1 // pred_fallthru
      _
    // Predicated region
    $region14: #{tpu_custom_call.1} parent=1 // pred_check
      _
    $region15: #{tpu_custom_call.1} parent=1 // pred_check_branch
      %20 = sbr.rel (0) target = $region17
    $region16: #{tpu_custom_call.1} parent=1 // pred_region
      _
    $region17: #{tpu_custom_call.1} parent=1 // pred_fallthru
      _
    // Predicated region
    $region18: #{tpu_custom_call.1} parent=1 // pred_check
      _
    $region19: #{tpu_custom_call.1} parent=1 // pred_check_branch
      %22 = sbr.rel (0) target = $region21
    $region20: #{tpu_custom_call.1} parent=1 // pred_region
      _
    $region21: #{tpu_custom_call.1} parent=1 // pred_fallthru
      _
    // Predicated region
    $region22: #{tpu_custom_call.1} parent=1 // pred_check
      _
    $region23: #{tpu_custom_call.1} parent=1 // pred_check_branch
      %24 = sbr.rel (0) target = $region25
    $region24: #{tpu_custom_call.1} parent=1 // pred_region
      _
    $region25: #{tpu_custom_call.1} parent=1 // pred_fallthru
      _
    // Predicated region
    $region26: #{tpu_custom_call.1} parent=1 // pred_check
      _
    $region27: #{tpu_custom_call.1} parent=1 // pred_check_branch
      %26 = sbr.rel (0) target = $region29
    $region28: #{tpu_custom_call.1} parent=1 // pred_region
      _
    $region29: #{tpu_custom_call.1} parent=1 // pred_fallthru
      _
    %v28 = vld [vmem:[%s0] sm:$0xf]
    %v29 = vld [vmem:[%s1] sm:$0xff]
    %v30 = vld [vmem:[%s1 + $0x8] sm:$0xff]
    %v31 = vld [vmem:[%s1 + $0x10] sm:$0xff]
    %v32 = vld [vmem:[%s1 + $0x18] sm:$0xff]
    %v33 = vld [vmem:[%s1 + $0x20] sm:$0xff]
    %v34 = vld [vmem:[%s1 + $0x28] sm:$0xff]
    %v35 = vld [vmem:[%s1 + $0x30] sm:$0xff]
    %v36 = vld [vmem:[%s1 + $0x38] sm:$0xff]
    %v37 = vld [vmem:[%s2] sm:$0xf]
    %v39 = vlaneseq
    %v40 = vshrl.u32 %v39, 7
    %v41 = vsub.s32 0, %v40
    %v42 = vrot.slane %v37, %v41
    %v43 = vlaneseq
    %v44 = vshrl.u32 %v43, 7
    %v45 = vsub.s32 1, %v44
    %v46 = vrot.slane %v37, %v45
    %v47 = vlaneseq
    %v48 = vshrl.u32 %v47, 7
    %v49 = vsub.s32 2, %v48
    %v50 = vrot.slane %v37, %v49
    %v51 = vlaneseq
    %v52 = vshrl.u32 %v51, 7
    %v53 = vsub.s32 3, %v52
    %v54 = vrot.slane %v37, %v53
    %v67 = vunpack.c.l.b16 %v29
    %v68 = vunpack.c.h.b16 %v29
    %v69 = vunpack.c.l.b16 %v30
    %v70 = vunpack.c.h.b16 %v30
    %v71 = vunpack.c.l.b16 %v31
    %v72 = vunpack.c.h.b16 %v31
    %v73 = vunpack.c.l.b16 %v32
    %v74 = vunpack.c.h.b16 %v32
    %v75 = vunpack.c.l.b16 %v33
    %v76 = vunpack.c.h.b16 %v33
    %v77 = vunpack.c.l.b16 %v34
    %v78 = vunpack.c.h.b16 %v34
    %v79 = vunpack.c.l.b16 %v35
    %v80 = vunpack.c.h.b16 %v35
    %v81 = vunpack.c.l.b16 %v36
    %v82 = vunpack.c.h.b16 %v36
    %v83 = vpack.c.b16 %v71, %v67
    %v84 = vpack.c.b16 %v72, %v68
    %v85 = vpack.c.b16 %v73, %v69
    %v86 = vpack.c.b16 %v74, %v70
    %v87 = vpack.c.b16 %v79, %v75
    %v88 = vpack.c.b16 %v80, %v76
    %v89 = vpack.c.b16 %v81, %v77
    %v90 = vpack.c.b16 %v82, %v78
    %vm99 = vcmask 261120
    %v101 = vsel %vm99, %v28, 0
    %103 = vmatprep.subr.bf16.mxu0 0
    %104 = vmatpush1.bf16.msra.mxu0 0
    %105 = vmatprep.subr.bf16.mxu0 0
    %106 = vmatpush1.bf16.msra.mxu0 0
    %107 = vmatprep.subr.bf16.mxu0 0
    %108 = vmatpush1.bf16.msra.mxu0 0
    %109 = vmatprep.subr.bf16.mxu0 0
    %110 = vmatpush1.bf16.msra.mxu0 0
    %111 = vmatprep.subr.bf16.mxu0 0
    %112 = vmatpush1.bf16.msra.mxu0 0
    %113 = vmatprep.subr.bf16.mxu0 0
    %114 = vmatpush1.bf16.msra.mxu0 0
    %115 = vmatprep.subr.bf16.mxu0 %v88
    %116 = vmatpush1.bf16.msra.mxu0 %v87
    %117 = vmatprep.subr.bf16.mxu0 %v84
    %118 = vmatpush1.bf16.msra.mxu0 %v83
    %119 = vmatprep.subr.bf16.mxu0 0
    %120 = vmatpush2.bf16.msra.mxu0 0
    %121 = vmatprep.subr.bf16.mxu0 0
    %122 = vmatpush2.bf16.msra.mxu0 0
    %123 = vmatprep.subr.bf16.mxu0 0
    %124 = vmatpush2.bf16.msra.mxu0 0
    %125 = vmatprep.subr.bf16.mxu0 0
    %126 = vmatpush2.bf16.msra.mxu0 0
    %127 = vmatprep.subr.bf16.mxu0 0
    %128 = vmatpush2.bf16.msra.mxu0 0
    %129 = vmatprep.subr.bf16.mxu0 0
    %130 = vmatpush2.bf16.msra.mxu0 0
    %131 = vmatprep.subr.bf16.mxu0 0
    %132 = vmatpush2.bf16.msra.mxu0 0
    %133 = vmatprep.subr.bf16.mxu0 0
    %134 = vmatpush2.bf16.msra.mxu0 0
    %135 = vmatprep.mubr.bf16.mxu0 0
    %136 = vmatmul.mubr.bf16.gmra.mxu0 %v101
    %v137 = vpop.f32.mrf.mxu0
    %v138 = vadd.f32 %v42, %v137
    %v139 = vpop.f32.mrf.mxu0
    %v140 = vadd.f32 %v46, %v139
    %v141 = vpop.f32.mrf.mxu0
    %v142 = vpop.f32.mrf.mxu0
    %143 = vdwg.mxu0
    %144 = vmatprep.subr.bf16.mxu0 0
    %145 = vmatpush1.bf16.msra.mxu0 0
    %146 = vmatprep.subr.bf16.mxu0 0
    %147 = vmatpush1.bf16.msra.mxu0 0
    %148 = vmatprep.subr.bf16.mxu0 0
    %149 = vmatpush1.bf16.msra.mxu0 0
    %150 = vmatprep.subr.bf16.mxu0 0
    %151 = vmatpush1.bf16.msra.mxu0 0
    %152 = vmatprep.subr.bf16.mxu0 0
    %153 = vmatpush1.bf16.msra.mxu0 0
    %154 = vmatprep.subr.bf16.mxu0 0
    %155 = vmatpush1.bf16.msra.mxu0 0
    %156 = vmatprep.subr.bf16.mxu0 %v90
    %157 = vmatpush1.bf16.msra.mxu0 %v89
    %158 = vmatprep.subr.bf16.mxu0 %v86
    %159 = vmatpush1.bf16.msra.mxu0 %v85
    %160 = vmatprep.subr.bf16.mxu0 0
    %161 = vmatpush2.bf16.msra.mxu0 0
    %162 = vmatprep.subr.bf16.mxu0 0
    %163 = vmatpush2.bf16.msra.mxu0 0
    %164 = vmatprep.subr.bf16.mxu0 0
    %165 = vmatpush2.bf16.msra.mxu0 0
    %166 = vmatprep.subr.bf16.mxu0 0
    %167 = vmatpush2.bf16.msra.mxu0 0
    %168 = vmatprep.subr.bf16.mxu0 0
    %169 = vmatpush2.bf16.msra.mxu0 0
    %170 = vmatprep.subr.bf16.mxu0 0
    %171 = vmatpush2.bf16.msra.mxu0 0
    %172 = vmatprep.subr.bf16.mxu0 0
    %173 = vmatpush2.bf16.msra.mxu0 0
    %174 = vmatprep.subr.bf16.mxu0 0
    %175 = vmatpush2.bf16.msra.mxu0 0
    %176 = vmatprep.mubr.bf16.mxu0 0
    %177 = vmatmul.mubr.bf16.gmra.mxu0 %v101
    %v178 = vpop.f32.mrf.mxu0
    %v179 = vadd.f32 %v50, %v178
    %v180 = vpop.f32.mrf.mxu0
    %v181 = vadd.f32 %v54, %v180
    %v182 = vpop.f32.mrf.mxu0
    %v183 = vpop.f32.mrf.mxu0
    %184 = vdwg.mxu0
    %v185 = vmax.f32 %v138, 0.0
    %v186 = vmax.f32 %v140, 0.0
    %v187 = vmax.f32 %v179, 0.0
    %v188 = vmax.f32 %v181, 0.0
    %v189 = vpack.c.bf16 %v185, %v185
    %v190 = vpack.c.bf16 %v186, %v186
    %v191 = vpack.c.bf16 %v187, %v187
    %v192 = vpack.c.bf16 %v188, %v188
    %v193 = vld [vmem:[%s3] sm:$0xff]
    %v194 = vld [vmem:[%s3 + $0x8] sm:$0xff]
    %v195 = vld [vmem:[%s3 + $0x10] sm:$0xff]
    %v196 = vld [vmem:[%s3 + $0x18] sm:$0xff]
    %v197 = vld [vmem:[%s3 + $0x20] sm:$0xff]
    %v198 = vld [vmem:[%s3 + $0x28] sm:$0xff]
    %v199 = vld [vmem:[%s3 + $0x30] sm:$0xff]
    %v200 = vld [vmem:[%s3 + $0x38] sm:$0xff]
    %v201 = vld [vmem:[%s3 + $0x40] sm:$0xff]
    %v202 = vld [vmem:[%s3 + $0x48] sm:$0xff]
    %v203 = vld [vmem:[%s3 + $0x50] sm:$0xff]
    %v204 = vld [vmem:[%s3 + $0x58] sm:$0xff]
    %v205 = vld [vmem:[%s3 + $0x60] sm:$0xff]
    %v206 = vld [vmem:[%s3 + $0x68] sm:$0xff]
    %v207 = vld [vmem:[%s3 + $0x70] sm:$0xff]
    %v208 = vld [vmem:[%s3 + $0x78] sm:$0xff]
    %v209 = vld [vmem:[%s3 + $0x80] sm:$0xff]
    %v210 = vld [vmem:[%s3 + $0x88] sm:$0xff]
    %v211 = vld [vmem:[%s3 + $0x90] sm:$0xff]
    %v212 = vld [vmem:[%s3 + $0x98] sm:$0xff]
    %v213 = vld [vmem:[%s3 + $0xa0] sm:$0xff]
    %v214 = vld [vmem:[%s3 + $0xa8] sm:$0xff]
    %v215 = vld [vmem:[%s3 + $0xb0] sm:$0xff]
    %v216 = vld [vmem:[%s3 + $0xb8] sm:$0xff]
    %v217 = vld [vmem:[%s3 + $0xc0] sm:$0xff]
    %v218 = vld [vmem:[%s3 + $0xc8] sm:$0xff]
    %v219 = vld [vmem:[%s3 + $0xd0] sm:$0xff]
    %v220 = vld [vmem:[%s3 + $0xd8] sm:$0xff]
    %v221 = vld [vmem:[%s3 + $0xe0] sm:$0xff]
    %v222 = vld [vmem:[%s3 + $0xe8] sm:$0xff]
    %v223 = vld [vmem:[%s3 + $0xf0] sm:$0xff]
    %v224 = vld [vmem:[%s3 + $0xf8] sm:$0xff]
    %v225 = vld [vmem:[%s3 + $0x100] sm:$0xff]
    %v226 = vld [vmem:[%s3 + $0x108] sm:$0xff]
    %v227 = vld [vmem:[%s3 + $0x110] sm:$0xff]
    %v228 = vld [vmem:[%s3 + $0x118] sm:$0xff]
    %v229 = vld [vmem:[%s3 + $0x120] sm:$0xff]
    %v230 = vld [vmem:[%s3 + $0x128] sm:$0xff]
    %v231 = vld [vmem:[%s3 + $0x130] sm:$0xff]
    %v232 = vld [vmem:[%s3 + $0x138] sm:$0xff]
    %v233 = vld [vmem:[%s3 + $0x140] sm:$0xff]
    %v234 = vld [vmem:[%s3 + $0x148] sm:$0xff]
    %v235 = vld [vmem:[%s3 + $0x150] sm:$0xff]
    %v236 = vld [vmem:[%s3 + $0x158] sm:$0xff]
    %v237 = vld [vmem:[%s3 + $0x160] sm:$0xff]
    %v238 = vld [vmem:[%s3 + $0x168] sm:$0xff]
    %v239 = vld [vmem:[%s3 + $0x170] sm:$0xff]
    %v240 = vld [vmem:[%s3 + $0x178] sm:$0xff]
    %v241 = vld [vmem:[%s3 + $0x180] sm:$0xff]
    %v242 = vld [vmem:[%s3 + $0x188] sm:$0xff]
    %v243 = vld [vmem:[%s3 + $0x190] sm:$0xff]
    %v244 = vld [vmem:[%s3 + $0x198] sm:$0xff]
    %v245 = vld [vmem:[%s3 + $0x1a0] sm:$0xff]
    %v246 = vld [vmem:[%s3 + $0x1a8] sm:$0xff]
    %v247 = vld [vmem:[%s3 + $0x1b0] sm:$0xff]
    %v248 = vld [vmem:[%s3 + $0x1b8] sm:$0xff]
    %v249 = vld [vmem:[%s3 + $0x1c0] sm:$0xff]
    %v250 = vld [vmem:[%s3 + $0x1c8] sm:$0xff]
    %v251 = vld [vmem:[%s3 + $0x1d0] sm:$0xff]
    %v252 = vld [vmem:[%s3 + $0x1d8] sm:$0xff]
    %v253 = vld [vmem:[%s3 + $0x1e0] sm:$0xff]
    %v254 = vld [vmem:[%s3 + $0x1e8] sm:$0xff]
    %v255 = vld [vmem:[%s3 + $0x1f0] sm:$0xff]
    %v256 = vld [vmem:[%s3 + $0x1f8] sm:$0xff]
    %v257 = vld [vmem:[%s3 + $0x200] sm:$0xff]
    %v258 = vld [vmem:[%s3 + $0x208] sm:$0xff]
    %v259 = vld [vmem:[%s3 + $0x210] sm:$0xff]
    %v260 = vld [vmem:[%s3 + $0x218] sm:$0xff]
    %v261 = vld [vmem:[%s3 + $0x220] sm:$0xff]
    %v262 = vld [vmem:[%s3 + $0x228] sm:$0xff]
    %v263 = vld [vmem:[%s3 + $0x230] sm:$0xff]
    %v264 = vld [vmem:[%s3 + $0x238] sm:$0xff]
    %v265 = vld [vmem:[%s3 + $0x240] sm:$0xff]
    %v266 = vld [vmem:[%s3 + $0x248] sm:$0xff]
    %v267 = vld [vmem:[%s3 + $0x250] sm:$0xff]
    %v268 = vld [vmem:[%s3 + $0x258] sm:$0xff]
    %v269 = vld [vmem:[%s3 + $0x260] sm:$0xff]
    %v270 = vld [vmem:[%s3 + $0x268] sm:$0xff]
    %v271 = vld [vmem:[%s3 + $0x270] sm:$0xff]
    %v272 = vld [vmem:[%s3 + $0x278] sm:$0xff]
    %v273 = vld [vmem:[%s3 + $0x280] sm:$0xff]
    %v274 = vld [vmem:[%s3 + $0x288] sm:$0xff]
    %v275 = vld [vmem:[%s3 + $0x290] sm:$0xff]
    %v276 = vld [vmem:[%s3 + $0x298] sm:$0xff]
    %v277 = vld [vmem:[%s3 + $0x2a0] sm:$0xff]
    %v278 = vld [vmem:[%s3 + $0x2a8] sm:$0xff]
    %v279 = vld [vmem:[%s3 + $0x2b0] sm:$0xff]
    %v280 = vld [vmem:[%s3 + $0x2b8] sm:$0xff]
    %v281 = vld [vmem:[%s3 + $0x2c0] sm:$0xff]
    %v282 = vld [vmem:[%s3 + $0x2c8] sm:$0xff]
    %v283 = vld [vmem:[%s3 + $0x2d0] sm:$0xff]
    %v284 = vld [vmem:[%s3 + $0x2d8] sm:$0xff]
    %v285 = vld [vmem:[%s3 + $0x2e0] sm:$0xff]
    %v286 = vld [vmem:[%s3 + $0x2e8] sm:$0xff]
    %v287 = vld [vmem:[%s3 + $0x2f0] sm:$0xff]
    %v288 = vld [vmem:[%s3 + $0x2f8] sm:$0xff]
    %v289 = vld [vmem:[%s3 + $0x300] sm:$0xff]
    %v290 = vld [vmem:[%s3 + $0x308] sm:$0xff]
    %v291 = vld [vmem:[%s3 + $0x310] sm:$0xff]
    %v292 = vld [vmem:[%s3 + $0x318] sm:$0xff]
    %v293 = vld [vmem:[%s3 + $0x320] sm:$0xff]
    %v294 = vld [vmem:[%s3 + $0x328] sm:$0xff]
    %v295 = vld [vmem:[%s3 + $0x330] sm:$0xff]
    %v296 = vld [vmem:[%s3 + $0x338] sm:$0xff]
    %v297 = vld [vmem:[%s3 + $0x340] sm:$0xff]
    %v298 = vld [vmem:[%s3 + $0x348] sm:$0xff]
    %v299 = vld [vmem:[%s3 + $0x350] sm:$0xff]
    %v300 = vld [vmem:[%s3 + $0x358] sm:$0xff]
    %v301 = vld [vmem:[%s3 + $0x360] sm:$0xff]
    %v302 = vld [vmem:[%s3 + $0x368] sm:$0xff]
    %v303 = vld [vmem:[%s3 + $0x370] sm:$0xff]
    %v304 = vld [vmem:[%s3 + $0x378] sm:$0xff]
    %v305 = vld [vmem:[%s3 + $0x380] sm:$0xff]
    %v306 = vld [vmem:[%s3 + $0x388] sm:$0xff]
    %v307 = vld [vmem:[%s3 + $0x390] sm:$0xff]
    %v308 = vld [vmem:[%s3 + $0x398] sm:$0xff]
    %v309 = vld [vmem:[%s3 + $0x3a0] sm:$0xff]
    %v310 = vld [vmem:[%s3 + $0x3a8] sm:$0xff]
    %v311 = vld [vmem:[%s3 + $0x3b0] sm:$0xff]
    %v312 = vld [vmem:[%s3 + $0x3b8] sm:$0xff]
    %v313 = vld [vmem:[%s3 + $0x3c0] sm:$0xff]
    %v314 = vld [vmem:[%s3 + $0x3c8] sm:$0xff]
    %v315 = vld [vmem:[%s3 + $0x3d0] sm:$0xff]
    %v316 = vld [vmem:[%s3 + $0x3d8] sm:$0xff]
    %v317 = vld [vmem:[%s3 + $0x3e0] sm:$0xff]
    %v318 = vld [vmem:[%s3 + $0x3e8] sm:$0xff]
    %v319 = vld [vmem:[%s3 + $0x3f0] sm:$0xff]
    %v320 = vld [vmem:[%s3 + $0x3f8] sm:$0xff]
    %v321 = vld [vmem:[%s4] sm:$0xf]
    %v323 = vlaneseq
    %v324 = vshrl.u32 %v323, 7
    %v325 = vsub.s32 0, %v324
    %v326 = vrot.slane %v321, %v325
    %v327 = vlaneseq
    %v328 = vshrl.u32 %v327, 7
    %v329 = vsub.s32 1, %v328
    %v330 = vrot.slane %v321, %v329
    %v331 = vlaneseq
    %v332 = vshrl.u32 %v331, 7
    %v333 = vsub.s32 2, %v332
    %v334 = vrot.slane %v321, %v333
    %v335 = vlaneseq
    %v336 = vshrl.u32 %v335, 7
    %v337 = vsub.s32 3, %v336
    %v338 = vrot.slane %v321, %v337
    %v471 = vunpack.c.l.b16 %v193
    %v472 = vunpack.c.h.b16 %v193
    %v473 = vunpack.c.l.b16 %v194
    %v474 = vunpack.c.h.b16 %v194
    %v475 = vunpack.c.l.b16 %v195
    %v476 = vunpack.c.h.b16 %v195
    %v477 = vunpack.c.l.b16 %v196
    %v478 = vunpack.c.h.b16 %v196
    %v479 = vunpack.c.l.b16 %v197
    %v480 = vunpack.c.h.b16 %v197
    %v481 = vunpack.c.l.b16 %v198
    %v482 = vunpack.c.h.b16 %v198
    %v483 = vunpack.c.l.b16 %v199
    %v484 = vunpack.c.h.b16 %v199
    %v485 = vunpack.c.l.b16 %v200
    %v486 = vunpack.c.h.b16 %v200
    %v487 = vunpack.c.l.b16 %v201
    %v488 = vunpack.c.h.b16 %v201
    %v489 = vunpack.c.l.b16 %v202
    %v490 = vunpack.c.h.b16 %v202
    %v491 = vunpack.c.l.b16 %v203
    %v492 = vunpack.c.h.b16 %v203
    %v493 = vunpack.c.l.b16 %v204
    %v494 = vunpack.c.h.b16 %v204
    %v495 = vunpack.c.l.b16 %v205
    %v496 = vunpack.c.h.b16 %v205
    %v497 = vunpack.c.l.b16 %v206
    %v498 = vunpack.c.h.b16 %v206
    %v499 = vunpack.c.l.b16 %v207
    %v500 = vunpack.c.h.b16 %v207
    %v501 = vunpack.c.l.b16 %v208
    %v502 = vunpack.c.h.b16 %v208
    %v503 = vunpack.c.l.b16 %v209
    %v504 = vunpack.c.h.b16 %v209
    %v505 = vunpack.c.l.b16 %v210
    %v506 = vunpack.c.h.b16 %v210
    %v507 = vunpack.c.l.b16 %v211
    %v508 = vunpack.c.h.b16 %v211
    %v509 = vunpack.c.l.b16 %v212
    %v510 = vunpack.c.h.b16 %v212
    %v511 = vunpack.c.l.b16 %v213
    %v512 = vunpack.c.h.b16 %v213
    %v513 = vunpack.c.l.b16 %v214
    %v514 = vunpack.c.h.b16 %v214
    %v515 = vunpack.c.l.b16 %v215
    %v516 = vunpack.c.h.b16 %v215
    %v517 = vunpack.c.l.b16 %v216
    %v518 = vunpack.c.h.b16 %v216
    %v519 = vunpack.c.l.b16 %v217
    %v520 = vunpack.c.h.b16 %v217
    %v521 = vunpack.c.l.b16 %v218
    %v522 = vunpack.c.h.b16 %v218
    %v523 = vunpack.c.l.b16 %v219
    %v524 = vunpack.c.h.b16 %v219
    %v525 = vunpack.c.l.b16 %v220
    %v526 = vunpack.c.h.b16 %v220
    %v527 = vunpack.c.l.b16 %v221
    %v528 = vunpack.c.h.b16 %v221
    %v529 = vunpack.c.l.b16 %v222
    %v530 = vunpack.c.h.b16 %v222
    %v531 = vunpack.c.l.b16 %v223
    %v532 = vunpack.c.h.b16 %v223
    %v533 = vunpack.c.l.b16 %v224
    %v534 = vunpack.c.h.b16 %v224
    %v535 = vunpack.c.l.b16 %v225
    %v536 = vunpack.c.h.b16 %v225
    %v537 = vunpack.c.l.b16 %v226
    %v538 = vunpack.c.h.b16 %v226
    %v539 = vunpack.c.l.b16 %v227
    %v540 = vunpack.c.h.b16 %v227
    %v541 = vunpack.c.l.b16 %v228
    %v542 = vunpack.c.h.b16 %v228
    %v543 = vunpack.c.l.b16 %v229
    %v544 = vunpack.c.h.b16 %v229
    %v545 = vunpack.c.l.b16 %v230
    %v546 = vunpack.c.h.b16 %v230
    %v547 = vunpack.c.l.b16 %v231
    %v548 = vunpack.c.h.b16 %v231
    %v549 = vunpack.c.l.b16 %v232
    %v550 = vunpack.c.h.b16 %v232
    %v551 = vunpack.c.l.b16 %v233
    %v552 = vunpack.c.h.b16 %v233
    %v553 = vunpack.c.l.b16 %v234
    %v554 = vunpack.c.h.b16 %v234
    %v555 = vunpack.c.l.b16 %v235
    %v556 = vunpack.c.h.b16 %v235
    %v557 = vunpack.c.l.b16 %v236
    %v558 = vunpack.c.h.b16 %v236
    %v559 = vunpack.c.l.b16 %v237
    %v560 = vunpack.c.h.b16 %v237
    %v561 = vunpack.c.l.b16 %v238
    %v562 = vunpack.c.h.b16 %v238
    %v563 = vunpack.c.l.b16 %v239
    %v564 = vunpack.c.h.b16 %v239
    %v565 = vunpack.c.l.b16 %v240
    %v566 = vunpack.c.h.b16 %v240
    %v567 = vunpack.c.l.b16 %v241
    %v568 = vunpack.c.h.b16 %v241
    %v569 = vunpack.c.l.b16 %v242
    %v570 = vunpack.c.h.b16 %v242
    %v571 = vunpack.c.l.b16 %v243
    %v572 = vunpack.c.h.b16 %v243
    %v573 = vunpack.c.l.b16 %v244
    %v574 = vunpack.c.h.b16 %v244
    %v575 = vunpack.c.l.b16 %v245
    %v576 = vunpack.c.h.b16 %v245
    %v577 = vunpack.c.l.b16 %v246
    %v578 = vunpack.c.h.b16 %v246
    %v579 = vunpack.c.l.b16 %v247
    %v580 = vunpack.c.h.b16 %v247
    %v581 = vunpack.c.l.b16 %v248
    %v582 = vunpack.c.h.b16 %v248
    %v583 = vunpack.c.l.b16 %v249
    %v584 = vunpack.c.h.b16 %v249
    %v585 = vunpack.c.l.b16 %v250
    %v586 = vunpack.c.h.b16 %v250
    %v587 = vunpack.c.l.b16 %v251
    %v588 = vunpack.c.h.b16 %v251
    %v589 = vunpack.c.l.b16 %v252
    %v590 = vunpack.c.h.b16 %v252
    %v591 = vunpack.c.l.b16 %v253
    %v592 = vunpack.c.h.b16 %v253
    %v593 = vunpack.c.l.b16 %v254
    %v594 = vunpack.c.h.b16 %v254
    %v595 = vunpack.c.l.b16 %v255
    %v596 = vunpack.c.h.b16 %v255
    %v597 = vunpack.c.l.b16 %v256
    %v598 = vunpack.c.h.b16 %v256
    %v599 = vunpack.c.l.b16 %v257
    %v600 = vunpack.c.h.b16 %v257
    %v601 = vunpack.c.l.b16 %v258
    %v602 = vunpack.c.h.b16 %v258
    %v603 = vunpack.c.l.b16 %v259
    %v604 = vunpack.c.h.b16 %v259
    %v605 = vunpack.c.l.b16 %v260
    %v606 = vunpack.c.h.b16 %v260
    %v607 = vunpack.c.l.b16 %v261
    %v608 = vunpack.c.h.b16 %v261
    %v609 = vunpack.c.l.b16 %v262
    %v610 = vunpack.c.h.b16 %v262
    %v611 = vunpack.c.l.b16 %v263
    %v612 = vunpack.c.h.b16 %v263
    %v613 = vunpack.c.l.b16 %v264
    %v614 = vunpack.c.h.b16 %v264
    %v615 = vunpack.c.l.b16 %v265
    %v616 = vunpack.c.h.b16 %v265
    %v617 = vunpack.c.l.b16 %v266
    %v618 = vunpack.c.h.b16 %v266
    %v619 = vunpack.c.l.b16 %v267
    %v620 = vunpack.c.h.b16 %v267
    %v621 = vunpack.c.l.b16 %v268
    %v622 = vunpack.c.h.b16 %v268
    %v623 = vunpack.c.l.b16 %v269
    %v624 = vunpack.c.h.b16 %v269
    %v625 = vunpack.c.l.b16 %v270
    %v626 = vunpack.c.h.b16 %v270
    %v627 = vunpack.c.l.b16 %v271
    %v628 = vunpack.c.h.b16 %v271
    %v629 = vunpack.c.l.b16 %v272
    %v630 = vunpack.c.h.b16 %v272
    %v631 = vunpack.c.l.b16 %v273
    %v632 = vunpack.c.h.b16 %v273
    %v633 = vunpack.c.l.b16 %v274
    %v634 = vunpack.c.h.b16 %v274
    %v635 = vunpack.c.l.b16 %v275
    %v636 = vunpack.c.h.b16 %v275
    %v637 = vunpack.c.l.b16 %v276
    %v638 = vunpack.c.h.b16 %v276
    %v639 = vunpack.c.l.b16 %v277
    %v640 = vunpack.c.h.b16 %v277
    %v641 = vunpack.c.l.b16 %v278
    %v642 = vunpack.c.h.b16 %v278
    %v643 = vunpack.c.l.b16 %v279
    %v644 = vunpack.c.h.b16 %v279
    %v645 = vunpack.c.l.b16 %v280
    %v646 = vunpack.c.h.b16 %v280
    %v647 = vunpack.c.l.b16 %v281
    %v648 = vunpack.c.h.b16 %v281
    %v649 = vunpack.c.l.b16 %v282
    %v650 = vunpack.c.h.b16 %v282
    %v651 = vunpack.c.l.b16 %v283
    %v652 = vunpack.c.h.b16 %v283
    %v653 = vunpack.c.l.b16 %v284
    %v654 = vunpack.c.h.b16 %v284
    %v655 = vunpack.c.l.b16 %v285
    %v656 = vunpack.c.h.b16 %v285
    %v657 = vunpack.c.l.b16 %v286
    %v658 = vunpack.c.h.b16 %v286
    %v659 = vunpack.c.l.b16 %v287
    %v660 = vunpack.c.h.b16 %v287
    %v661 = vunpack.c.l.b16 %v288
    %v662 = vunpack.c.h.b16 %v288
    %v663 = vunpack.c.l.b16 %v289
    %v664 = vunpack.c.h.b16 %v289
    %v665 = vunpack.c.l.b16 %v290
    %v666 = vunpack.c.h.b16 %v290
    %v667 = vunpack.c.l.b16 %v291
    %v668 = vunpack.c.h.b16 %v291
    %v669 = vunpack.c.l.b16 %v292
    %v670 = vunpack.c.h.b16 %v292
    %v671 = vunpack.c.l.b16 %v293
    %v672 = vunpack.c.h.b16 %v293
    %v673 = vunpack.c.l.b16 %v294
    %v674 = vunpack.c.h.b16 %v294
    %v675 = vunpack.c.l.b16 %v295
    %v676 = vunpack.c.h.b16 %v295
    %v677 = vunpack.c.l.b16 %v296
    %v678 = vunpack.c.h.b16 %v296
    %v679 = vunpack.c.l.b16 %v297
    %v680 = vunpack.c.h.b16 %v297
    %v681 = vunpack.c.l.b16 %v298
    %v682 = vunpack.c.h.b16 %v298
    %v683 = vunpack.c.l.b16 %v299
    %v684 = vunpack.c.h.b16 %v299
    %v685 = vunpack.c.l.b16 %v300
    %v686 = vunpack.c.h.b16 %v300
    %v687 = vunpack.c.l.b16 %v301
    %v688 = vunpack.c.h.b16 %v301
    %v689 = vunpack.c.l.b16 %v302
    %v690 = vunpack.c.h.b16 %v302
    %v691 = vunpack.c.l.b16 %v303
    %v692 = vunpack.c.h.b16 %v303
    %v693 = vunpack.c.l.b16 %v304
    %v694 = vunpack.c.h.b16 %v304
    %v695 = vunpack.c.l.b16 %v305
    %v696 = vunpack.c.h.b16 %v305
    %v697 = vunpack.c.l.b16 %v306
    %v698 = vunpack.c.h.b16 %v306
    %v699 = vunpack.c.l.b16 %v307
    %v700 = vunpack.c.h.b16 %v307
    %v701 = vunpack.c.l.b16 %v308
    %v702 = vunpack.c.h.b16 %v308
    %v703 = vunpack.c.l.b16 %v309
    %v704 = vunpack.c.h.b16 %v309
    %v705 = vunpack.c.l.b16 %v310
    %v706 = vunpack.c.h.b16 %v310
    %v707 = vunpack.c.l.b16 %v311
    %v708 = vunpack.c.h.b16 %v311
    %v709 = vunpack.c.l.b16 %v312
    %v710 = vunpack.c.h.b16 %v312
    %v711 = vunpack.c.l.b16 %v313
    %v712 = vunpack.c.h.b16 %v313
    %v713 = vunpack.c.l.b16 %v314
    %v714 = vunpack.c.h.b16 %v314
    %v715 = vunpack.c.l.b16 %v315
    %v716 = vunpack.c.h.b16 %v315
    %v717 = vunpack.c.l.b16 %v316
    %v718 = vunpack.c.h.b16 %v316
    %v719 = vunpack.c.l.b16 %v317
    %v720 = vunpack.c.h.b16 %v317
    %v721 = vunpack.c.l.b16 %v318
    %v722 = vunpack.c.h.b16 %v318
    %v723 = vunpack.c.l.b16 %v319
    %v724 = vunpack.c.h.b16 %v319
    %v725 = vunpack.c.l.b16 %v320
    %v726 = vunpack.c.h.b16 %v320
    %v727 = vpack.c.b16 %v475, %v471
    %v728 = vpack.c.b16 %v476, %v472
    %v729 = vpack.c.b16 %v477, %v473
    %v730 = vpack.c.b16 %v478, %v474
    %v731 = vpack.c.b16 %v483, %v479
    %v732 = vpack.c.b16 %v484, %v480
    %v733 = vpack.c.b16 %v485, %v481
    %v734 = vpack.c.b16 %v486, %v482
    %v735 = vpack.c.b16 %v491, %v487
    %v736 = vpack.c.b16 %v492, %v488
    %v737 = vpack.c.b16 %v493, %v489
    %v738 = vpack.c.b16 %v494, %v490
    %v739 = vpack.c.b16 %v499, %v495
    %v740 = vpack.c.b16 %v500, %v496
    %v741 = vpack.c.b16 %v501, %v497
    %v742 = vpack.c.b16 %v502, %v498
    %v743 = vpack.c.b16 %v507, %v503
    %v744 = vpack.c.b16 %v508, %v504
    %v745 = vpack.c.b16 %v509, %v505
    %v746 = vpack.c.b16 %v510, %v506
    %v747 = vpack.c.b16 %v515, %v511
    %v748 = vpack.c.b16 %v516, %v512
    %v749 = vpack.c.b16 %v517, %v513
    %v750 = vpack.c.b16 %v518, %v514
    %v751 = vpack.c.b16 %v523, %v519
    %v752 = vpack.c.b16 %v524, %v520
    %v753 = vpack.c.b16 %v525, %v521
    %v754 = vpack.c.b16 %v526, %v522
    %v755 = vpack.c.b16 %v531, %v527
    %v756 = vpack.c.b16 %v532, %v528
    %v757 = vpack.c.b16 %v533, %v529
    %v758 = vpack.c.b16 %v534, %v530
    %v759 = vpack.c.b16 %v539, %v535
    %v760 = vpack.c.b16 %v540, %v536
    %v761 = vpack.c.b16 %v541, %v537
    %v762 = vpack.c.b16 %v542, %v538
    %v763 = vpack.c.b16 %v547, %v543
    %v764 = vpack.c.b16 %v548, %v544
    %v765 = vpack.c.b16 %v549, %v545
    %v766 = vpack.c.b16 %v550, %v546
    %v767 = vpack.c.b16 %v555, %v551
    %v768 = vpack.c.b16 %v556, %v552
    %v769 = vpack.c.b16 %v557, %v553
    %v770 = vpack.c.b16 %v558, %v554
    %v771 = vpack.c.b16 %v563, %v559
    %v772 = vpack.c.b16 %v564, %v560
    %v773 = vpack.c.b16 %v565, %v561
    %v774 = vpack.c.b16 %v566, %v562
    %v775 = vpack.c.b16 %v571, %v567
    %v776 = vpack.c.b16 %v572, %v568
    %v777 = vpack.c.b16 %v573, %v569
    %v778 = vpack.c.b16 %v574, %v570
    %v779 = vpack.c.b16 %v579, %v575
    %v780 = vpack.c.b16 %v580, %v576
    %v781 = vpack.c.b16 %v581, %v577
    %v782 = vpack.c.b16 %v582, %v578
    %v783 = vpack.c.b16 %v587, %v583
    %v784 = vpack.c.b16 %v588, %v584
    %v785 = vpack.c.b16 %v589, %v585
    %v786 = vpack.c.b16 %v590, %v586
    %v787 = vpack.c.b16 %v595, %v591
    %v788 = vpack.c.b16 %v596, %v592
    %v789 = vpack.c.b16 %v597, %v593
    %v790 = vpack.c.b16 %v598, %v594
    %v791 = vpack.c.b16 %v603, %v599
    %v792 = vpack.c.b16 %v604, %v600
    %v793 = vpack.c.b16 %v605, %v601
    %v794 = vpack.c.b16 %v606, %v602
    %v795 = vpack.c.b16 %v611, %v607
    %v796 = vpack.c.b16 %v612, %v608
    %v797 = vpack.c.b16 %v613, %v609
    %v798 = vpack.c.b16 %v614, %v610
    %v799 = vpack.c.b16 %v619, %v615
    %v800 = vpack.c.b16 %v620, %v616
    %v801 = vpack.c.b16 %v621, %v617
    %v802 = vpack.c.b16 %v622, %v618
    %v803 = vpack.c.b16 %v627, %v623
    %v804 = vpack.c.b16 %v628, %v624
    %v805 = vpack.c.b16 %v629, %v625
    %v806 = vpack.c.b16 %v630, %v626
    %v807 = vpack.c.b16 %v635, %v631
    %v808 = vpack.c.b16 %v636, %v632
    %v809 = vpack.c.b16 %v637, %v633
    %v810 = vpack.c.b16 %v638, %v634
    %v811 = vpack.c.b16 %v643, %v639
    %v812 = vpack.c.b16 %v644, %v640
    %v813 = vpack.c.b16 %v645, %v641
    %v814 = vpack.c.b16 %v646, %v642
    %v815 = vpack.c.b16 %v651, %v647
    %v816 = vpack.c.b16 %v652, %v648
    %v817 = vpack.c.b16 %v653, %v649
    %v818 = vpack.c.b16 %v654, %v650
    %v819 = vpack.c.b16 %v659, %v655
    %v820 = vpack.c.b16 %v660, %v656
    %v821 = vpack.c.b16 %v661, %v657
    %v822 = vpack.c.b16 %v662, %v658
    %v823 = vpack.c.b16 %v667, %v663
    %v824 = vpack.c.b16 %v668, %v664
    %v825 = vpack.c.b16 %v669, %v665
    %v826 = vpack.c.b16 %v670, %v666
    %v827 = vpack.c.b16 %v675, %v671
    %v828 = vpack.c.b16 %v676, %v672
    %v829 = vpack.c.b16 %v677, %v673
    %v830 = vpack.c.b16 %v678, %v674
    %v831 = vpack.c.b16 %v683, %v679
    %v832 = vpack.c.b16 %v684, %v680
    %v833 = vpack.c.b16 %v685, %v681
    %v834 = vpack.c.b16 %v686, %v682
    %v835 = vpack.c.b16 %v691, %v687
    %v836 = vpack.c.b16 %v692, %v688
    %v837 = vpack.c.b16 %v693, %v689
    %v838 = vpack.c.b16 %v694, %v690
    %v839 = vpack.c.b16 %v699, %v695
    %v840 = vpack.c.b16 %v700, %v696
    %v841 = vpack.c.b16 %v701, %v697
    %v842 = vpack.c.b16 %v702, %v698
    %v843 = vpack.c.b16 %v707, %v703
    %v844 = vpack.c.b16 %v708, %v704
    %v845 = vpack.c.b16 %v709, %v705
    %v846 = vpack.c.b16 %v710, %v706
    %v847 = vpack.c.b16 %v715, %v711
    %v848 = vpack.c.b16 %v716, %v712
    %v849 = vpack.c.b16 %v717, %v713
    %v850 = vpack.c.b16 %v718, %v714
    %v851 = vpack.c.b16 %v723, %v719
    %v852 = vpack.c.b16 %v724, %v720
    %v853 = vpack.c.b16 %v725, %v721
    %v854 = vpack.c.b16 %v726, %v722
    %983 = vmatprep.subr.bf16.mxu0 %v756
    %984 = vmatpush1.bf16.msra.mxu0 %v755
    %985 = vmatprep.subr.bf16.mxu0 %v752
    %986 = vmatpush1.bf16.msra.mxu0 %v751
    %987 = vmatprep.subr.bf16.mxu0 %v748
    %988 = vmatpush1.bf16.msra.mxu0 %v747
    %989 = vmatprep.subr.bf16.mxu0 %v744
    %990 = vmatpush1.bf16.msra.mxu0 %v743
    %991 = vmatprep.subr.bf16.mxu0 %v740
    %992 = vmatpush1.bf16.msra.mxu0 %v739
    %993 = vmatprep.subr.bf16.mxu0 %v736
    %994 = vmatpush1.bf16.msra.mxu0 %v735
    %995 = vmatprep.subr.bf16.mxu0 %v732
    %996 = vmatpush1.bf16.msra.mxu0 %v731
    %997 = vmatprep.subr.bf16.mxu0 %v728
    %998 = vmatpush1.bf16.msra.mxu0 %v727
    %999 = vmatprep.subr.bf16.mxu0 %v788
    %1000 = vmatpush2.bf16.msra.mxu0 %v787
    %1001 = vmatprep.subr.bf16.mxu0 %v784
    %1002 = vmatpush2.bf16.msra.mxu0 %v783
    %1003 = vmatprep.subr.bf16.mxu0 %v780
    %1004 = vmatpush2.bf16.msra.mxu0 %v779
    %1005 = vmatprep.subr.bf16.mxu0 %v776
    %1006 = vmatpush2.bf16.msra.mxu0 %v775
    %1007 = vmatprep.subr.bf16.mxu0 %v772
    %1008 = vmatpush2.bf16.msra.mxu0 %v771
    %1009 = vmatprep.subr.bf16.mxu0 %v768
    %1010 = vmatpush2.bf16.msra.mxu0 %v767
    %1011 = vmatprep.subr.bf16.mxu0 %v764
    %1012 = vmatpush2.bf16.msra.mxu0 %v763
    %1013 = vmatprep.subr.bf16.mxu0 %v760
    %1014 = vmatpush2.bf16.msra.mxu0 %v759
    %1015 = vmatprep.mubr.bf16.mxu0 %v190
    %1016 = vmatmul.mubr.bf16.gmra.mxu0 %v189
    %v1017 = vpop.f32.mrf.mxu0
    %v1018 = vadd.f32 %v326, %v1017
    %v1019 = vpop.f32.mrf.mxu0
    %v1020 = vadd.f32 %v330, %v1019
    %v1021 = vpop.f32.mrf.mxu0
    %v1022 = vpop.f32.mrf.mxu0
    %1023 = vdwg.mxu0
    %1024 = vmatprep.subr.bf16.mxu0 %v820
    %1025 = vmatpush1.bf16.msra.mxu0 %v819
    %1026 = vmatprep.subr.bf16.mxu0 %v816
    %1027 = vmatpush1.bf16.msra.mxu0 %v815
    %1028 = vmatprep.subr.bf16.mxu0 %v812
    %1029 = vmatpush1.bf16.msra.mxu0 %v811
    %1030 = vmatprep.subr.bf16.mxu0 %v808
    %1031 = vmatpush1.bf16.msra.mxu0 %v807
    %1032 = vmatprep.subr.bf16.mxu0 %v804
    %1033 = vmatpush1.bf16.msra.mxu0 %v803
    %1034 = vmatprep.subr.bf16.mxu0 %v800
    %1035 = vmatpush1.bf16.msra.mxu0 %v799
    %1036 = vmatprep.subr.bf16.mxu0 %v796
    %1037 = vmatpush1.bf16.msra.mxu0 %v795
    %1038 = vmatprep.subr.bf16.mxu0 %v792
    %1039 = vmatpush1.bf16.msra.mxu0 %v791
    %1040 = vmatprep.subr.bf16.mxu0 %v852
    %1041 = vmatpush2.bf16.msra.mxu0 %v851
    %1042 = vmatprep.subr.bf16.mxu0 %v848
    %1043 = vmatpush2.bf16.msra.mxu0 %v847
    %1044 = vmatprep.subr.bf16.mxu0 %v844
    %1045 = vmatpush2.bf16.msra.mxu0 %v843
    %1046 = vmatprep.subr.bf16.mxu0 %v840
    %1047 = vmatpush2.bf16.msra.mxu0 %v839
    %1048 = vmatprep.subr.bf16.mxu0 %v836
    %1049 = vmatpush2.bf16.msra.mxu0 %v835
    %1050 = vmatprep.subr.bf16.mxu0 %v832
    %1051 = vmatpush2.bf16.msra.mxu0 %v831
    %1052 = vmatprep.subr.bf16.mxu0 %v828
    %1053 = vmatpush2.bf16.msra.mxu0 %v827
    %1054 = vmatprep.subr.bf16.mxu0 %v824
    %1055 = vmatpush2.bf16.msra.mxu0 %v823
    %1056 = vmatprep.mubr.bf16.mxu0 %v192
    %1057 = vmatmul.mubr.bf16.gmra.mxu0 %v191
    %v1058 = vpop.f32.mrf.mxu0
    %v1059 = vadd.f32 %v1018, %v1058
    %v1060 = vpop.f32.mrf.mxu0
    %v1061 = vadd.f32 %v1020, %v1060
    %v1062 = vpop.f32.mrf.mxu0
    %v1063 = vpop.f32.mrf.mxu0
    %1064 = vdwg.mxu0
    %1065 = vmatprep.subr.bf16.mxu0 %v758
    %1066 = vmatpush1.bf16.msra.mxu0 %v757
    %1067 = vmatprep.subr.bf16.mxu0 %v754
    %1068 = vmatpush1.bf16.msra.mxu0 %v753
    %1069 = vmatprep.subr.bf16.mxu0 %v750
    %1070 = vmatpush1.bf16.msra.mxu0 %v749
    %1071 = vmatprep.subr.bf16.mxu0 %v746
    %1072 = vmatpush1.bf16.msra.mxu0 %v745
    %1073 = vmatprep.subr.bf16.mxu0 %v742
    %1074 = vmatpush1.bf16.msra.mxu0 %v741
    %1075 = vmatprep.subr.bf16.mxu0 %v738
    %1076 = vmatpush1.bf16.msra.mxu0 %v737
    %1077 = vmatprep.subr.bf16.mxu0 %v734
    %1078 = vmatpush1.bf16.msra.mxu0 %v733
    %1079 = vmatprep.subr.bf16.mxu0 %v730
    %1080 = vmatpush1.bf16.msra.mxu0 %v729
    %1081 = vmatprep.subr.bf16.mxu0 %v790
    %1082 = vmatpush2.bf16.msra.mxu0 %v789
    %1083 = vmatprep.subr.bf16.mxu0 %v786
    %1084 = vmatpush2.bf16.msra.mxu0 %v785
    %1085 = vmatprep.subr.bf16.mxu0 %v782
    %1086 = vmatpush2.bf16.msra.mxu0 %v781
    %1087 = vmatprep.subr.bf16.mxu0 %v778
    %1088 = vmatpush2.bf16.msra.mxu0 %v777
    %1089 = vmatprep.subr.bf16.mxu0 %v774
    %1090 = vmatpush2.bf16.msra.mxu0 %v773
    %1091 = vmatprep.subr.bf16.mxu0 %v770
    %1092 = vmatpush2.bf16.msra.mxu0 %v769
    %1093 = vmatprep.subr.bf16.mxu0 %v766
    %1094 = vmatpush2.bf16.msra.mxu0 %v765
    %1095 = vmatprep.subr.bf16.mxu0 %v762
    %1096 = vmatpush2.bf16.msra.mxu0 %v761
    %1097 = vmatprep.mubr.bf16.mxu0 %v190
    %1098 = vmatmul.mubr.bf16.gmra.mxu0 %v189
    %v1099 = vpop.f32.mrf.mxu0
    %v1100 = vadd.f32 %v334, %v1099
    %v1101 = vpop.f32.mrf.mxu0
    %v1102 = vadd.f32 %v338, %v1101
    %v1103 = vpop.f32.mrf.mxu0
    %v1104 = vpop.f32.mrf.mxu0
    %1105 = vdwg.mxu0
    %1106 = vmatprep.subr.bf16.mxu0 %v822
    %1107 = vmatpush1.bf16.msra.mxu0 %v821
    %1108 = vmatprep.subr.bf16.mxu0 %v818
    %1109 = vmatpush1.bf16.msra.mxu0 %v817
    %1110 = vmatprep.subr.bf16.mxu0 %v814
    %1111 = vmatpush1.bf16.msra.mxu0 %v813
    %1112 = vmatprep.subr.bf16.mxu0 %v810
    %1113 = vmatpush1.bf16.msra.mxu0 %v809
    %1114 = vmatprep.subr.bf16.mxu0 %v806
    %1115 = vmatpush1.bf16.msra.mxu0 %v805
    %1116 = vmatprep.subr.bf16.mxu0 %v802
    %1117 = vmatpush1.bf16.msra.mxu0 %v801
    %1118 = vmatprep.subr.bf16.mxu0 %v798
    %1119 = vmatpush1.bf16.msra.mxu0 %v797
    %1120 = vmatprep.subr.bf16.mxu0 %v794
    %1121 = vmatpush1.bf16.msra.mxu0 %v793
    %1122 = vmatprep.subr.bf16.mxu0 %v854
    %1123 = vmatpush2.bf16.msra.mxu0 %v853
    %1124 = vmatprep.subr.bf16.mxu0 %v850
    %1125 = vmatpush2.bf16.msra.mxu0 %v849
    %1126 = vmatprep.subr.bf16.mxu0 %v846
    %1127 = vmatpush2.bf16.msra.mxu0 %v845
    %1128 = vmatprep.subr.bf16.mxu0 %v842
    %1129 = vmatpush2.bf16.msra.mxu0 %v841
    %1130 = vmatprep.subr.bf16.mxu0 %v838
    %1131 = vmatpush2.bf16.msra.mxu0 %v837
    %1132 = vmatprep.subr.bf16.mxu0 %v834
    %1133 = vmatpush2.bf16.msra.mxu0 %v833
    %1134 = vmatprep.subr.bf16.mxu0 %v830
    %1135 = vmatpush2.bf16.msra.mxu0 %v829
    %1136 = vmatprep.subr.bf16.mxu0 %v826
    %1137 = vmatpush2.bf16.msra.mxu0 %v825
    %1138 = vmatprep.mubr.bf16.mxu0 %v192
    %1139 = vmatmul.mubr.bf16.gmra.mxu0 %v191
    %v1140 = vpop.f32.mrf.mxu0
    %v1141 = vadd.f32 %v1100, %v1140
    %v1142 = vpop.f32.mrf.mxu0
    %v1143 = vadd.f32 %v1102, %v1142
    %v1144 = vpop.f32.mrf.mxu0
    %v1145 = vpop.f32.mrf.mxu0
    %1146 = vdwg.mxu0
    %v1147 = vmax.f32 %v1059, 0.0
    %v1148 = vmax.f32 %v1061, 0.0
    %v1149 = vmax.f32 %v1141, 0.0
    %v1150 = vmax.f32 %v1143, 0.0
    %v1151 = vpack.c.bf16 %v1147, %v1147
    %v1152 = vpack.c.bf16 %v1148, %v1148
    %v1153 = vpack.c.bf16 %v1149, %v1149
    %v1154 = vpack.c.bf16 %v1150, %v1150
    %v1155 = vld [vmem:[%s5] sm:$0xff]
    %v1156 = vld [vmem:[%s5 + $0x8] sm:$0xff]
    %v1157 = vld [vmem:[%s5 + $0x10] sm:$0xff]
    %v1158 = vld [vmem:[%s5 + $0x18] sm:$0xf]
    %v1159 = vld [vmem:[%s5 + $0x1c] sm:$0xff]
    %v1160 = vld [vmem:[%s5 + $0x24] sm:$0xff]
    %v1161 = vld [vmem:[%s5 + $0x2c] sm:$0xff]
    %v1162 = vld [vmem:[%s5 + $0x34] sm:$0xf]
    %v1163 = vld [vmem:[%s5 + $0x38] sm:$0xff]
    %v1164 = vld [vmem:[%s5 + $0x40] sm:$0xff]
    %v1165 = vld [vmem:[%s5 + $0x48] sm:$0xff]
    %v1166 = vld [vmem:[%s5 + $0x50] sm:$0xf]
    %v1167 = vld [vmem:[%s5 + $0x54] sm:$0xff]
    %v1168 = vld [vmem:[%s5 + $0x5c] sm:$0xff]
    %v1169 = vld [vmem:[%s5 + $0x64] sm:$0xff]
    %v1170 = vld [vmem:[%s5 + $0x6c] sm:$0xf]
    %v1171 = vld [vmem:[%s5 + $0x70] sm:$0xff]
    %v1172 = vld [vmem:[%s5 + $0x78] sm:$0xff]
    %v1173 = vld [vmem:[%s5 + $0x80] sm:$0xff]
    %v1174 = vld [vmem:[%s5 + $0x88] sm:$0xf]
    %v1175 = vld [vmem:[%s5 + $0x8c] sm:$0xff]
    %v1176 = vld [vmem:[%s5 + $0x94] sm:$0xff]
    %v1177 = vld [vmem:[%s5 + $0x9c] sm:$0xff]
    %v1178 = vld [vmem:[%s5 + $0xa4] sm:$0xf]
    %v1179 = vld [vmem:[%s5 + $0xa8] sm:$0xff]
    %v1180 = vld [vmem:[%s5 + $0xb0] sm:$0xff]
    %v1181 = vld [vmem:[%s5 + $0xb8] sm:$0xff]
    %v1182 = vld [vmem:[%s5 + $0xc0] sm:$0xf]
    %v1183 = vld [vmem:[%s5 + $0xc4] sm:$0xff]
    %v1184 = vld [vmem:[%s5 + $0xcc] sm:$0xff]
    %v1185 = vld [vmem:[%s5 + $0xd4] sm:$0xff]
    %v1186 = vld [vmem:[%s5 + $0xdc] sm:$0xf]
    %v1187 = vld [vmem:[%s5 + $0xe0] sm:$0xff]
    %v1188 = vld [vmem:[%s5 + $0xe8] sm:$0xff]
    %v1189 = vld [vmem:[%s5 + $0xf0] sm:$0xff]
    %v1190 = vld [vmem:[%s5 + $0xf8] sm:$0xf]
    %v1191 = vld [vmem:[%s5 + $0xfc] sm:$0xff]
    %v1192 = vld [vmem:[%s5 + $0x104] sm:$0xff]
    %v1193 = vld [vmem:[%s5 + $0x10c] sm:$0xff]
    %v1194 = vld [vmem:[%s5 + $0x114] sm:$0xf]
    %v1195 = vld [vmem:[%s5 + $0x118] sm:$0xff]
    %v1196 = vld [vmem:[%s5 + $0x120] sm:$0xff]
    %v1197 = vld [vmem:[%s5 + $0x128] sm:$0xff]
    %v1198 = vld [vmem:[%s5 + $0x130] sm:$0xf]
    %v1199 = vld [vmem:[%s5 + $0x134] sm:$0xff]
    %v1200 = vld [vmem:[%s5 + $0x13c] sm:$0xff]
    %v1201 = vld [vmem:[%s5 + $0x144] sm:$0xff]
    %v1202 = vld [vmem:[%s5 + $0x14c] sm:$0xf]
    %v1203 = vld [vmem:[%s5 + $0x150] sm:$0xff]
    %v1204 = vld [vmem:[%s5 + $0x158] sm:$0xff]
    %v1205 = vld [vmem:[%s5 + $0x160] sm:$0xff]
    %v1206 = vld [vmem:[%s5 + $0x168] sm:$0xf]
    %v1207 = vld [vmem:[%s5 + $0x16c] sm:$0xff]
    %v1208 = vld [vmem:[%s5 + $0x174] sm:$0xff]
    %v1209 = vld [vmem:[%s5 + $0x17c] sm:$0xff]
    %v1210 = vld [vmem:[%s5 + $0x184] sm:$0xf]
    %v1211 = vld [vmem:[%s5 + $0x188] sm:$0xff]
    %v1212 = vld [vmem:[%s5 + $0x190] sm:$0xff]
    %v1213 = vld [vmem:[%s5 + $0x198] sm:$0xff]
    %v1214 = vld [vmem:[%s5 + $0x1a0] sm:$0xf]
    %v1215 = vld [vmem:[%s5 + $0x1a4] sm:$0xff]
    %v1216 = vld [vmem:[%s5 + $0x1ac] sm:$0xff]
    %v1217 = vld [vmem:[%s5 + $0x1b4] sm:$0xff]
    %v1218 = vld [vmem:[%s5 + $0x1bc] sm:$0xf]
    %v1219 = vld [vmem:[%s5 + $0x1c0] sm:$0xff]
    %v1220 = vld [vmem:[%s5 + $0x1c8] sm:$0xff]
    %v1221 = vld [vmem:[%s5 + $0x1d0] sm:$0xff]
    %v1222 = vld [vmem:[%s5 + $0x1d8] sm:$0xf]
    %v1223 = vld [vmem:[%s5 + $0x1dc] sm:$0xff]
    %v1224 = vld [vmem:[%s5 + $0x1e4] sm:$0xff]
    %v1225 = vld [vmem:[%s5 + $0x1ec] sm:$0xff]
    %v1226 = vld [vmem:[%s5 + $0x1f4] sm:$0xf]
    %v1227 = vld [vmem:[%s5 + $0x1f8] sm:$0xff]
    %v1228 = vld [vmem:[%s5 + $0x200] sm:$0xff]
    %v1229 = vld [vmem:[%s5 + $0x208] sm:$0xff]
    %v1230 = vld [vmem:[%s5 + $0x210] sm:$0xf]
    %v1231 = vld [vmem:[%s5 + $0x214] sm:$0xff]
    %v1232 = vld [vmem:[%s5 + $0x21c] sm:$0xff]
    %v1233 = vld [vmem:[%s5 + $0x224] sm:$0xff]
    %v1234 = vld [vmem:[%s5 + $0x22c] sm:$0xf]
    %v1235 = vld [vmem:[%s5 + $0x230] sm:$0xff]
    %v1236 = vld [vmem:[%s5 + $0x238] sm:$0xff]
    %v1237 = vld [vmem:[%s5 + $0x240] sm:$0xff]
    %v1238 = vld [vmem:[%s5 + $0x248] sm:$0xf]
    %v1239 = vld [vmem:[%s5 + $0x24c] sm:$0xff]
    %v1240 = vld [vmem:[%s5 + $0x254] sm:$0xff]
    %v1241 = vld [vmem:[%s5 + $0x25c] sm:$0xff]
    %v1242 = vld [vmem:[%s5 + $0x264] sm:$0xf]
    %v1243 = vld [vmem:[%s5 + $0x268] sm:$0xff]
    %v1244 = vld [vmem:[%s5 + $0x270] sm:$0xff]
    %v1245 = vld [vmem:[%s5 + $0x278] sm:$0xff]
    %v1246 = vld [vmem:[%s5 + $0x280] sm:$0xf]
    %v1247 = vld [vmem:[%s5 + $0x284] sm:$0xff]
    %v1248 = vld [vmem:[%s5 + $0x28c] sm:$0xff]
    %v1249 = vld [vmem:[%s5 + $0x294] sm:$0xff]
    %v1250 = vld [vmem:[%s5 + $0x29c] sm:$0xf]
    %v1251 = vld [vmem:[%s5 + $0x2a0] sm:$0xff]
    %v1252 = vld [vmem:[%s5 + $0x2a8] sm:$0xff]
    %v1253 = vld [vmem:[%s5 + $0x2b0] sm:$0xff]
    %v1254 = vld [vmem:[%s5 + $0x2b8] sm:$0xf]
    %v1255 = vld [vmem:[%s5 + $0x2bc] sm:$0xff]
    %v1256 = vld [vmem:[%s5 + $0x2c4] sm:$0xff]
    %v1257 = vld [vmem:[%s5 + $0x2cc] sm:$0xff]
    %v1258 = vld [vmem:[%s5 + $0x2d4] sm:$0xf]
    %v1259 = vld [vmem:[%s5 + $0x2d8] sm:$0xff]
    %v1260 = vld [vmem:[%s5 + $0x2e0] sm:$0xff]
    %v1261 = vld [vmem:[%s5 + $0x2e8] sm:$0xff]
    %v1262 = vld [vmem:[%s5 + $0x2f0] sm:$0xf]
    %v1263 = vld [vmem:[%s5 + $0x2f4] sm:$0xff]
    %v1264 = vld [vmem:[%s5 + $0x2fc] sm:$0xff]
    %v1265 = vld [vmem:[%s5 + $0x304] sm:$0xff]
    %v1266 = vld [vmem:[%s5 + $0x30c] sm:$0xf]
    %v1267 = vld [vmem:[%s5 + $0x310] sm:$0xff]
    %v1268 = vld [vmem:[%s5 + $0x318] sm:$0xff]
    %v1269 = vld [vmem:[%s5 + $0x320] sm:$0xff]
    %v1270 = vld [vmem:[%s5 + $0x328] sm:$0xf]
    %v1271 = vld [vmem:[%s5 + $0x32c] sm:$0xff]
    %v1272 = vld [vmem:[%s5 + $0x334] sm:$0xff]
    %v1273 = vld [vmem:[%s5 + $0x33c] sm:$0xff]
    %v1274 = vld [vmem:[%s5 + $0x344] sm:$0xf]
    %v1275 = vld [vmem:[%s5 + $0x348] sm:$0xff]
    %v1276 = vld [vmem:[%s5 + $0x350] sm:$0xff]
    %v1277 = vld [vmem:[%s5 + $0x358] sm:$0xff]
    %v1278 = vld [vmem:[%s5 + $0x360] sm:$0xf]
    %v1279 = vld [vmem:[%s5 + $0x364] sm:$0xff]
    %v1280 = vld [vmem:[%s5 + $0x36c] sm:$0xff]
    %v1281 = vld [vmem:[%s5 + $0x374] sm:$0xff]
    %v1282 = vld [vmem:[%s5 + $0x37c] sm:$0xf]
    %v1283 = vld [vmem:[%s5 + $0x380] sm:$0xff]
    %v1284 = vld [vmem:[%s5 + $0x388] sm:$0xff]
    %v1285 = vld [vmem:[%s5 + $0x390] sm:$0xff]
    %v1286 = vld [vmem:[%s5 + $0x398] sm:$0xf]
    %v1287 = vld [vmem:[%s5 + $0x39c] sm:$0xff]
    %v1288 = vld [vmem:[%s5 + $0x3a4] sm:$0xff]
    %v1289 = vld [vmem:[%s5 + $0x3ac] sm:$0xff]
    %v1290 = vld [vmem:[%s5 + $0x3b4] sm:$0xf]
    %v1291 = vld [vmem:[%s5 + $0x3b8] sm:$0xff]
    %v1292 = vld [vmem:[%s5 + $0x3c0] sm:$0xff]
    %v1293 = vld [vmem:[%s5 + $0x3c8] sm:$0xff]
    %v1294 = vld [vmem:[%s5 + $0x3d0] sm:$0xf]
    %v1295 = vld [vmem:[%s5 + $0x3d4] sm:$0xff]
    %v1296 = vld [vmem:[%s5 + $0x3dc] sm:$0xff]
    %v1297 = vld [vmem:[%s5 + $0x3e4] sm:$0xff]
    %v1298 = vld [vmem:[%s5 + $0x3ec] sm:$0xf]
    %v1299 = vld [vmem:[%s5 + $0x3f0] sm:$0xff]
    %v1300 = vld [vmem:[%s5 + $0x3f8] sm:$0xff]
    %v1301 = vld [vmem:[%s5 + $0x400] sm:$0xff]
    %v1302 = vld [vmem:[%s5 + $0x408] sm:$0xf]
    %v1303 = vld [vmem:[%s5 + $0x40c] sm:$0xff]
    %v1304 = vld [vmem:[%s5 + $0x414] sm:$0xff]
    %v1305 = vld [vmem:[%s5 + $0x41c] sm:$0xff]
    %v1306 = vld [vmem:[%s5 + $0x424] sm:$0xf]
    %v1307 = vld [vmem:[%s5 + $0x428] sm:$0xff]
    %v1308 = vld [vmem:[%s5 + $0x430] sm:$0xff]
    %v1309 = vld [vmem:[%s5 + $0x438] sm:$0xff]
    %v1310 = vld [vmem:[%s5 + $0x440] sm:$0xf]
    %v1311 = vld [vmem:[%s5 + $0x444] sm:$0xff]
    %v1312 = vld [vmem:[%s5 + $0x44c] sm:$0xff]
    %v1313 = vld [vmem:[%s5 + $0x454] sm:$0xff]
    %v1314 = vld [vmem:[%s5 + $0x45c] sm:$0xf]
    %v1315 = vld [vmem:[%s5 + $0x460] sm:$0xff]
    %v1316 = vld [vmem:[%s5 + $0x468] sm:$0xff]
    %v1317 = vld [vmem:[%s5 + $0x470] sm:$0xff]
    %v1318 = vld [vmem:[%s5 + $0x478] sm:$0xf]
    %v1319 = vld [vmem:[%s5 + $0x47c] sm:$0xff]
    %v1320 = vld [vmem:[%s5 + $0x484] sm:$0xff]
    %v1321 = vld [vmem:[%s5 + $0x48c] sm:$0xff]
    %v1322 = vld [vmem:[%s5 + $0x494] sm:$0xf]
    %v1323 = vld [vmem:[%s5 + $0x498] sm:$0xff]
    %v1324 = vld [vmem:[%s5 + $0x4a0] sm:$0xff]
    %v1325 = vld [vmem:[%s5 + $0x4a8] sm:$0xff]
    %v1326 = vld [vmem:[%s5 + $0x4b0] sm:$0xf]
    %v1327 = vld [vmem:[%s5 + $0x4b4] sm:$0xff]
    %v1328 = vld [vmem:[%s5 + $0x4bc] sm:$0xff]
    %v1329 = vld [vmem:[%s5 + $0x4c4] sm:$0xff]
    %v1330 = vld [vmem:[%s5 + $0x4cc] sm:$0xf]
    %v1331 = vld [vmem:[%s5 + $0x4d0] sm:$0xff]
    %v1332 = vld [vmem:[%s5 + $0x4d8] sm:$0xff]
    %v1333 = vld [vmem:[%s5 + $0x4e0] sm:$0xff]
    %v1334 = vld [vmem:[%s5 + $0x4e8] sm:$0xf]
    %v1335 = vld [vmem:[%s5 + $0x4ec] sm:$0xff]
    %v1336 = vld [vmem:[%s5 + $0x4f4] sm:$0xff]
    %v1337 = vld [vmem:[%s5 + $0x4fc] sm:$0xff]
    %v1338 = vld [vmem:[%s5 + $0x504] sm:$0xf]
    %v1339 = vld [vmem:[%s5 + $0x508] sm:$0xff]
    %v1340 = vld [vmem:[%s5 + $0x510] sm:$0xff]
    %v1341 = vld [vmem:[%s5 + $0x518] sm:$0xff]
    %v1342 = vld [vmem:[%s5 + $0x520] sm:$0xf]
    %v1343 = vld [vmem:[%s5 + $0x524] sm:$0xff]
    %v1344 = vld [vmem:[%s5 + $0x52c] sm:$0xff]
    %v1345 = vld [vmem:[%s5 + $0x534] sm:$0xff]
    %v1346 = vld [vmem:[%s5 + $0x53c] sm:$0xf]
    %v1347 = vld [vmem:[%s5 + $0x540] sm:$0xff]
    %v1348 = vld [vmem:[%s5 + $0x548] sm:$0xff]
    %v1349 = vld [vmem:[%s5 + $0x550] sm:$0xff]
    %v1350 = vld [vmem:[%s5 + $0x558] sm:$0xf]
    %v1351 = vld [vmem:[%s5 + $0x55c] sm:$0xff]
    %v1352 = vld [vmem:[%s5 + $0x564] sm:$0xff]
    %v1353 = vld [vmem:[%s5 + $0x56c] sm:$0xff]
    %v1354 = vld [vmem:[%s5 + $0x574] sm:$0xf]
    %v1355 = vld [vmem:[%s5 + $0x578] sm:$0xff]
    %v1356 = vld [vmem:[%s5 + $0x580] sm:$0xff]
    %v1357 = vld [vmem:[%s5 + $0x588] sm:$0xff]
    %v1358 = vld [vmem:[%s5 + $0x590] sm:$0xf]
    %v1359 = vld [vmem:[%s5 + $0x594] sm:$0xff]
    %v1360 = vld [vmem:[%s5 + $0x59c] sm:$0xff]
    %v1361 = vld [vmem:[%s5 + $0x5a4] sm:$0xff]
    %v1362 = vld [vmem:[%s5 + $0x5ac] sm:$0xf]
    %v1363 = vld [vmem:[%s5 + $0x5b0] sm:$0xff]
    %v1364 = vld [vmem:[%s5 + $0x5b8] sm:$0xff]
    %v1365 = vld [vmem:[%s5 + $0x5c0] sm:$0xff]
    %v1366 = vld [vmem:[%s5 + $0x5c8] sm:$0xf]
    %v1367 = vld [vmem:[%s5 + $0x5cc] sm:$0xff]
    %v1368 = vld [vmem:[%s5 + $0x5d4] sm:$0xff]
    %v1369 = vld [vmem:[%s5 + $0x5dc] sm:$0xff]
    %v1370 = vld [vmem:[%s5 + $0x5e4] sm:$0xf]
    %v1371 = vld [vmem:[%s5 + $0x5e8] sm:$0xff]
    %v1372 = vld [vmem:[%s5 + $0x5f0] sm:$0xff]
    %v1373 = vld [vmem:[%s5 + $0x5f8] sm:$0xff]
    %v1374 = vld [vmem:[%s5 + $0x600] sm:$0xf]
    %v1375 = vld [vmem:[%s5 + $0x604] sm:$0xff]
    %v1376 = vld [vmem:[%s5 + $0x60c] sm:$0xff]
    %v1377 = vld [vmem:[%s5 + $0x614] sm:$0xff]
    %v1378 = vld [vmem:[%s5 + $0x61c] sm:$0xf]
    %v1379 = vld [vmem:[%s5 + $0x620] sm:$0xff]
    %v1380 = vld [vmem:[%s5 + $0x628] sm:$0xff]
    %v1381 = vld [vmem:[%s5 + $0x630] sm:$0xff]
    %v1382 = vld [vmem:[%s5 + $0x638] sm:$0xf]
    %v1383 = vld [vmem:[%s5 + $0x63c] sm:$0xff]
    %v1384 = vld [vmem:[%s5 + $0x644] sm:$0xff]
    %v1385 = vld [vmem:[%s5 + $0x64c] sm:$0xff]
    %v1386 = vld [vmem:[%s5 + $0x654] sm:$0xf]
    %v1387 = vld [vmem:[%s5 + $0x658] sm:$0xff]
    %v1388 = vld [vmem:[%s5 + $0x660] sm:$0xff]
    %v1389 = vld [vmem:[%s5 + $0x668] sm:$0xff]
    %v1390 = vld [vmem:[%s5 + $0x670] sm:$0xf]
    %v1391 = vld [vmem:[%s5 + $0x674] sm:$0xff]
    %v1392 = vld [vmem:[%s5 + $0x67c] sm:$0xff]
    %v1393 = vld [vmem:[%s5 + $0x684] sm:$0xff]
    %v1394 = vld [vmem:[%s5 + $0x68c] sm:$0xf]
    %v1395 = vld [vmem:[%s5 + $0x690] sm:$0xff]
    %v1396 = vld [vmem:[%s5 + $0x698] sm:$0xff]
    %v1397 = vld [vmem:[%s5 + $0x6a0] sm:$0xff]
    %v1398 = vld [vmem:[%s5 + $0x6a8] sm:$0xf]
    %v1399 = vld [vmem:[%s5 + $0x6ac] sm:$0xff]
    %v1400 = vld [vmem:[%s5 + $0x6b4] sm:$0xff]
    %v1401 = vld [vmem:[%s5 + $0x6bc] sm:$0xff]
    %v1402 = vld [vmem:[%s5 + $0x6c4] sm:$0xf]
    %v1403 = vld [vmem:[%s5 + $0x6c8] sm:$0xff]
    %v1404 = vld [vmem:[%s5 + $0x6d0] sm:$0xff]
    %v1405 = vld [vmem:[%s5 + $0x6d8] sm:$0xff]
    %v1406 = vld [vmem:[%s5 + $0x6e0] sm:$0xf]
    %v1407 = vld [vmem:[%s5 + $0x6e4] sm:$0xff]
    %v1408 = vld [vmem:[%s5 + $0x6ec] sm:$0xff]
    %v1409 = vld [vmem:[%s5 + $0x6f4] sm:$0xff]
    %v1410 = vld [vmem:[%s5 + $0x6fc] sm:$0xf]
    %v1411 = vld [vmem:[%s6] sm:$0x7f]
    %v1413 = vlaneseq
    %v1414 = vshrl.u32 %v1413, 7
    %v1415 = vsub.s32 0, %v1414
    %v1416 = vrot.slane %v1411, %v1415
    %v1417 = vlaneseq
    %v1418 = vshrl.u32 %v1417, 7
    %v1419 = vsub.s32 1, %v1418
    %v1420 = vrot.slane %v1411, %v1419
    %v1421 = vlaneseq
    %v1422 = vshrl.u32 %v1421, 7
    %v1423 = vsub.s32 2, %v1422
    %v1424 = vrot.slane %v1411, %v1423
    %v1425 = vlaneseq
    %v1426 = vshrl.u32 %v1425, 7
    %v1427 = vsub.s32 3, %v1426
    %v1428 = vrot.slane %v1411, %v1427
    %v1429 = vlaneseq
    %v1430 = vshrl.u32 %v1429, 7
    %v1431 = vsub.s32 4, %v1430
    %v1432 = vrot.slane %v1411, %v1431
    %v1433 = vlaneseq
    %v1434 = vshrl.u32 %v1433, 7
    %v1435 = vsub.s32 5, %v1434
    %v1436 = vrot.slane %v1411, %v1435
    %v1437 = vlaneseq
    %v1438 = vshrl.u32 %v1437, 7
    %v1439 = vsub.s32 6, %v1438
    %v1440 = vrot.slane %v1411, %v1439
    %v1704 = vunpack.c.l.b16 %v1155
    %v1705 = vunpack.c.h.b16 %v1155
    %v1706 = vunpack.c.l.b16 %v1156
    %v1707 = vunpack.c.h.b16 %v1156
    %v1708 = vunpack.c.l.b16 %v1157
    %v1709 = vunpack.c.h.b16 %v1157
    %v1710 = vunpack.c.l.b16 %v1158
    %v1711 = vunpack.c.l.b16 %v1159
    %v1712 = vunpack.c.h.b16 %v1159
    %v1713 = vunpack.c.l.b16 %v1160
    %v1714 = vunpack.c.h.b16 %v1160
    %v1715 = vunpack.c.l.b16 %v1161
    %v1716 = vunpack.c.h.b16 %v1161
    %v1717 = vunpack.c.l.b16 %v1162
    %v1718 = vunpack.c.l.b16 %v1163
    %v1719 = vunpack.c.h.b16 %v1163
    %v1720 = vunpack.c.l.b16 %v1164
    %v1721 = vunpack.c.h.b16 %v1164
    %v1722 = vunpack.c.l.b16 %v1165
    %v1723 = vunpack.c.h.b16 %v1165
    %v1724 = vunpack.c.l.b16 %v1166
    %v1725 = vunpack.c.l.b16 %v1167
    %v1726 = vunpack.c.h.b16 %v1167
    %v1727 = vunpack.c.l.b16 %v1168
    %v1728 = vunpack.c.h.b16 %v1168
    %v1729 = vunpack.c.l.b16 %v1169
    %v1730 = vunpack.c.h.b16 %v1169
    %v1731 = vunpack.c.l.b16 %v1170
    %v1732 = vunpack.c.l.b16 %v1171
    %v1733 = vunpack.c.h.b16 %v1171
    %v1734 = vunpack.c.l.b16 %v1172
    %v1735 = vunpack.c.h.b16 %v1172
    %v1736 = vunpack.c.l.b16 %v1173
    %v1737 = vunpack.c.h.b16 %v1173
    %v1738 = vunpack.c.l.b16 %v1174
    %v1739 = vunpack.c.l.b16 %v1175
    %v1740 = vunpack.c.h.b16 %v1175
    %v1741 = vunpack.c.l.b16 %v1176
    %v1742 = vunpack.c.h.b16 %v1176
    %v1743 = vunpack.c.l.b16 %v1177
    %v1744 = vunpack.c.h.b16 %v1177
    %v1745 = vunpack.c.l.b16 %v1178
    %v1746 = vunpack.c.l.b16 %v1179
    %v1747 = vunpack.c.h.b16 %v1179
    %v1748 = vunpack.c.l.b16 %v1180
    %v1749 = vunpack.c.h.b16 %v1180
    %v1750 = vunpack.c.l.b16 %v1181
    %v1751 = vunpack.c.h.b16 %v1181
    %v1752 = vunpack.c.l.b16 %v1182
    %v1753 = vunpack.c.l.b16 %v1183
    %v1754 = vunpack.c.h.b16 %v1183
    %v1755 = vunpack.c.l.b16 %v1184
    %v1756 = vunpack.c.h.b16 %v1184
    %v1757 = vunpack.c.l.b16 %v1185
    %v1758 = vunpack.c.h.b16 %v1185
    %v1759 = vunpack.c.l.b16 %v1186
    %v1760 = vunpack.c.l.b16 %v1187
    %v1761 = vunpack.c.h.b16 %v1187
    %v1762 = vunpack.c.l.b16 %v1188
    %v1763 = vunpack.c.h.b16 %v1188
    %v1764 = vunpack.c.l.b16 %v1189
    %v1765 = vunpack.c.h.b16 %v1189
    %v1766 = vunpack.c.l.b16 %v1190
    %v1767 = vunpack.c.l.b16 %v1191
    %v1768 = vunpack.c.h.b16 %v1191
    %v1769 = vunpack.c.l.b16 %v1192
    %v1770 = vunpack.c.h.b16 %v1192
    %v1771 = vunpack.c.l.b16 %v1193
    %v1772 = vunpack.c.h.b16 %v1193
    %v1773 = vunpack.c.l.b16 %v1194
    %v1774 = vunpack.c.l.b16 %v1195
    %v1775 = vunpack.c.h.b16 %v1195
    %v1776 = vunpack.c.l.b16 %v1196
    %v1777 = vunpack.c.h.b16 %v1196
    %v1778 = vunpack.c.l.b16 %v1197
    %v1779 = vunpack.c.h.b16 %v1197
    %v1780 = vunpack.c.l.b16 %v1198
    %v1781 = vunpack.c.l.b16 %v1199
    %v1782 = vunpack.c.h.b16 %v1199
    %v1783 = vunpack.c.l.b16 %v1200
    %v1784 = vunpack.c.h.b16 %v1200
    %v1785 = vunpack.c.l.b16 %v1201
    %v1786 = vunpack.c.h.b16 %v1201
    %v1787 = vunpack.c.l.b16 %v1202
    %v1788 = vunpack.c.l.b16 %v1203
    %v1789 = vunpack.c.h.b16 %v1203
    %v1790 = vunpack.c.l.b16 %v1204
    %v1791 = vunpack.c.h.b16 %v1204
    %v1792 = vunpack.c.l.b16 %v1205
    %v1793 = vunpack.c.h.b16 %v1205
    %v1794 = vunpack.c.l.b16 %v1206
    %v1795 = vunpack.c.l.b16 %v1207
    %v1796 = vunpack.c.h.b16 %v1207
    %v1797 = vunpack.c.l.b16 %v1208
    %v1798 = vunpack.c.h.b16 %v1208
    %v1799 = vunpack.c.l.b16 %v1209
    %v1800 = vunpack.c.h.b16 %v1209
    %v1801 = vunpack.c.l.b16 %v1210
    %v1802 = vunpack.c.l.b16 %v1211
    %v1803 = vunpack.c.h.b16 %v1211
    %v1804 = vunpack.c.l.b16 %v1212
    %v1805 = vunpack.c.h.b16 %v1212
    %v1806 = vunpack.c.l.b16 %v1213
    %v1807 = vunpack.c.h.b16 %v1213
    %v1808 = vunpack.c.l.b16 %v1214
    %v1809 = vunpack.c.l.b16 %v1215
    %v1810 = vunpack.c.h.b16 %v1215
    %v1811 = vunpack.c.l.b16 %v1216
    %v1812 = vunpack.c.h.b16 %v1216
    %v1813 = vunpack.c.l.b16 %v1217
    %v1814 = vunpack.c.h.b16 %v1217
    %v1815 = vunpack.c.l.b16 %v1218
    %v1816 = vunpack.c.l.b16 %v1219
    %v1817 = vunpack.c.h.b16 %v1219
    %v1818 = vunpack.c.l.b16 %v1220
    %v1819 = vunpack.c.h.b16 %v1220
    %v1820 = vunpack.c.l.b16 %v1221
    %v1821 = vunpack.c.h.b16 %v1221
    %v1822 = vunpack.c.l.b16 %v1222
    %v1823 = vunpack.c.l.b16 %v1223
    %v1824 = vunpack.c.h.b16 %v1223
    %v1825 = vunpack.c.l.b16 %v1224
    %v1826 = vunpack.c.h.b16 %v1224
    %v1827 = vunpack.c.l.b16 %v1225
    %v1828 = vunpack.c.h.b16 %v1225
    %v1829 = vunpack.c.l.b16 %v1226
    %v1830 = vunpack.c.l.b16 %v1227
    %v1831 = vunpack.c.h.b16 %v1227
    %v1832 = vunpack.c.l.b16 %v1228
    %v1833 = vunpack.c.h.b16 %v1228
    %v1834 = vunpack.c.l.b16 %v1229
    %v1835 = vunpack.c.h.b16 %v1229
    %v1836 = vunpack.c.l.b16 %v1230
    %v1837 = vunpack.c.l.b16 %v1231
    %v1838 = vunpack.c.h.b16 %v1231
    %v1839 = vunpack.c.l.b16 %v1232
    %v1840 = vunpack.c.h.b16 %v1232
    %v1841 = vunpack.c.l.b16 %v1233
    %v1842 = vunpack.c.h.b16 %v1233
    %v1843 = vunpack.c.l.b16 %v1234
    %v1844 = vunpack.c.l.b16 %v1235
    %v1845 = vunpack.c.h.b16 %v1235
    %v1846 = vunpack.c.l.b16 %v1236
    %v1847 = vunpack.c.h.b16 %v1236
    %v1848 = vunpack.c.l.b16 %v1237
    %v1849 = vunpack.c.h.b16 %v1237
    %v1850 = vunpack.c.l.b16 %v1238
    %v1851 = vunpack.c.l.b16 %v1239
    %v1852 = vunpack.c.h.b16 %v1239
    %v1853 = vunpack.c.l.b16 %v1240
    %v1854 = vunpack.c.h.b16 %v1240
    %v1855 = vunpack.c.l.b16 %v1241
    %v1856 = vunpack.c.h.b16 %v1241
    %v1857 = vunpack.c.l.b16 %v1242
    %v1858 = vunpack.c.l.b16 %v1243
    %v1859 = vunpack.c.h.b16 %v1243
    %v1860 = vunpack.c.l.b16 %v1244
    %v1861 = vunpack.c.h.b16 %v1244
    %v1862 = vunpack.c.l.b16 %v1245
    %v1863 = vunpack.c.h.b16 %v1245
    %v1864 = vunpack.c.l.b16 %v1246
    %v1865 = vunpack.c.l.b16 %v1247
    %v1866 = vunpack.c.h.b16 %v1247
    %v1867 = vunpack.c.l.b16 %v1248
    %v1868 = vunpack.c.h.b16 %v1248
    %v1869 = vunpack.c.l.b16 %v1249
    %v1870 = vunpack.c.h.b16 %v1249
    %v1871 = vunpack.c.l.b16 %v1250
    %v1872 = vunpack.c.l.b16 %v1251
    %v1873 = vunpack.c.h.b16 %v1251
    %v1874 = vunpack.c.l.b16 %v1252
    %v1875 = vunpack.c.h.b16 %v1252
    %v1876 = vunpack.c.l.b16 %v1253
    %v1877 = vunpack.c.h.b16 %v1253
    %v1878 = vunpack.c.l.b16 %v1254
    %v1879 = vunpack.c.l.b16 %v1255
    %v1880 = vunpack.c.h.b16 %v1255
    %v1881 = vunpack.c.l.b16 %v1256
    %v1882 = vunpack.c.h.b16 %v1256
    %v1883 = vunpack.c.l.b16 %v1257
    %v1884 = vunpack.c.h.b16 %v1257
    %v1885 = vunpack.c.l.b16 %v1258
    %v1886 = vunpack.c.l.b16 %v1259
    %v1887 = vunpack.c.h.b16 %v1259
    %v1888 = vunpack.c.l.b16 %v1260
    %v1889 = vunpack.c.h.b16 %v1260
    %v1890 = vunpack.c.l.b16 %v1261
    %v1891 = vunpack.c.h.b16 %v1261
    %v1892 = vunpack.c.l.b16 %v1262
    %v1893 = vunpack.c.l.b16 %v1263
    %v1894 = vunpack.c.h.b16 %v1263
    %v1895 = vunpack.c.l.b16 %v1264
    %v1896 = vunpack.c.h.b16 %v1264
    %v1897 = vunpack.c.l.b16 %v1265
    %v1898 = vunpack.c.h.b16 %v1265
    %v1899 = vunpack.c.l.b16 %v1266
    %v1900 = vunpack.c.l.b16 %v1267
    %v1901 = vunpack.c.h.b16 %v1267
    %v1902 = vunpack.c.l.b16 %v1268
    %v1903 = vunpack.c.h.b16 %v1268
    %v1904 = vunpack.c.l.b16 %v1269
    %v1905 = vunpack.c.h.b16 %v1269
    %v1906 = vunpack.c.l.b16 %v1270
    %v1907 = vunpack.c.l.b16 %v1271
    %v1908 = vunpack.c.h.b16 %v1271
    %v1909 = vunpack.c.l.b16 %v1272
    %v1910 = vunpack.c.h.b16 %v1272
    %v1911 = vunpack.c.l.b16 %v1273
    %v1912 = vunpack.c.h.b16 %v1273
    %v1913 = vunpack.c.l.b16 %v1274
    %v1914 = vunpack.c.l.b16 %v1275
    %v1915 = vunpack.c.h.b16 %v1275
    %v1916 = vunpack.c.l.b16 %v1276
    %v1917 = vunpack.c.h.b16 %v1276
    %v1918 = vunpack.c.l.b16 %v1277
    %v1919 = vunpack.c.h.b16 %v1277
    %v1920 = vunpack.c.l.b16 %v1278
    %v1921 = vunpack.c.l.b16 %v1279
    %v1922 = vunpack.c.h.b16 %v1279
    %v1923 = vunpack.c.l.b16 %v1280
    %v1924 = vunpack.c.h.b16 %v1280
    %v1925 = vunpack.c.l.b16 %v1281
    %v1926 = vunpack.c.h.b16 %v1281
    %v1927 = vunpack.c.l.b16 %v1282
    %v1928 = vunpack.c.l.b16 %v1283
    %v1929 = vunpack.c.h.b16 %v1283
    %v1930 = vunpack.c.l.b16 %v1284
    %v1931 = vunpack.c.h.b16 %v1284
    %v1932 = vunpack.c.l.b16 %v1285
    %v1933 = vunpack.c.h.b16 %v1285
    %v1934 = vunpack.c.l.b16 %v1286
    %v1935 = vunpack.c.l.b16 %v1287
    %v1936 = vunpack.c.h.b16 %v1287
    %v1937 = vunpack.c.l.b16 %v1288
    %v1938 = vunpack.c.h.b16 %v1288
    %v1939 = vunpack.c.l.b16 %v1289
    %v1940 = vunpack.c.h.b16 %v1289
    %v1941 = vunpack.c.l.b16 %v1290
    %v1942 = vunpack.c.l.b16 %v1291
    %v1943 = vunpack.c.h.b16 %v1291
    %v1944 = vunpack.c.l.b16 %v1292
    %v1945 = vunpack.c.h.b16 %v1292
    %v1946 = vunpack.c.l.b16 %v1293
    %v1947 = vunpack.c.h.b16 %v1293
    %v1948 = vunpack.c.l.b16 %v1294
    %v1949 = vunpack.c.l.b16 %v1295
    %v1950 = vunpack.c.h.b16 %v1295
    %v1951 = vunpack.c.l.b16 %v1296
    %v1952 = vunpack.c.h.b16 %v1296
    %v1953 = vunpack.c.l.b16 %v1297
    %v1954 = vunpack.c.h.b16 %v1297
    %v1955 = vunpack.c.l.b16 %v1298
    %v1956 = vunpack.c.l.b16 %v1299
    %v1957 = vunpack.c.h.b16 %v1299
    %v1958 = vunpack.c.l.b16 %v1300
    %v1959 = vunpack.c.h.b16 %v1300
    %v1960 = vunpack.c.l.b16 %v1301
    %v1961 = vunpack.c.h.b16 %v1301
    %v1962 = vunpack.c.l.b16 %v1302
    %v1963 = vunpack.c.l.b16 %v1303
    %v1964 = vunpack.c.h.b16 %v1303
    %v1965 = vunpack.c.l.b16 %v1304
    %v1966 = vunpack.c.h.b16 %v1304
    %v1967 = vunpack.c.l.b16 %v1305
    %v1968 = vunpack.c.h.b16 %v1305
    %v1969 = vunpack.c.l.b16 %v1306
    %v1970 = vunpack.c.l.b16 %v1307
    %v1971 = vunpack.c.h.b16 %v1307
    %v1972 = vunpack.c.l.b16 %v1308
    %v1973 = vunpack.c.h.b16 %v1308
    %v1974 = vunpack.c.l.b16 %v1309
    %v1975 = vunpack.c.h.b16 %v1309
    %v1976 = vunpack.c.l.b16 %v1310
    %v1977 = vunpack.c.l.b16 %v1311
    %v1978 = vunpack.c.h.b16 %v1311
    %v1979 = vunpack.c.l.b16 %v1312
    %v1980 = vunpack.c.h.b16 %v1312
    %v1981 = vunpack.c.l.b16 %v1313
    %v1982 = vunpack.c.h.b16 %v1313
    %v1983 = vunpack.c.l.b16 %v1314
    %v1984 = vunpack.c.l.b16 %v1315
    %v1985 = vunpack.c.h.b16 %v1315
    %v1986 = vunpack.c.l.b16 %v1316
    %v1987 = vunpack.c.h.b16 %v1316
    %v1988 = vunpack.c.l.b16 %v1317
    %v1989 = vunpack.c.h.b16 %v1317
    %v1990 = vunpack.c.l.b16 %v1318
    %v1991 = vunpack.c.l.b16 %v1319
    %v1992 = vunpack.c.h.b16 %v1319
    %v1993 = vunpack.c.l.b16 %v1320
    %v1994 = vunpack.c.h.b16 %v1320
    %v1995 = vunpack.c.l.b16 %v1321
    %v1996 = vunpack.c.h.b16 %v1321
    %v1997 = vunpack.c.l.b16 %v1322
    %v1998 = vunpack.c.l.b16 %v1323
    %v1999 = vunpack.c.h.b16 %v1323
    %v2000 = vunpack.c.l.b16 %v1324
    %v2001 = vunpack.c.h.b16 %v1324
    %v2002 = vunpack.c.l.b16 %v1325
    %v2003 = vunpack.c.h.b16 %v1325
    %v2004 = vunpack.c.l.b16 %v1326
    %v2005 = vunpack.c.l.b16 %v1327
    %v2006 = vunpack.c.h.b16 %v1327
    %v2007 = vunpack.c.l.b16 %v1328
    %v2008 = vunpack.c.h.b16 %v1328
    %v2009 = vunpack.c.l.b16 %v1329
    %v2010 = vunpack.c.h.b16 %v1329
    %v2011 = vunpack.c.l.b16 %v1330
    %v2012 = vunpack.c.l.b16 %v1331
    %v2013 = vunpack.c.h.b16 %v1331
    %v2014 = vunpack.c.l.b16 %v1332
    %v2015 = vunpack.c.h.b16 %v1332
    %v2016 = vunpack.c.l.b16 %v1333
    %v2017 = vunpack.c.h.b16 %v1333
    %v2018 = vunpack.c.l.b16 %v1334
    %v2019 = vunpack.c.l.b16 %v1335
    %v2020 = vunpack.c.h.b16 %v1335
    %v2021 = vunpack.c.l.b16 %v1336
    %v2022 = vunpack.c.h.b16 %v1336
    %v2023 = vunpack.c.l.b16 %v1337
    %v2024 = vunpack.c.h.b16 %v1337
    %v2025 = vunpack.c.l.b16 %v1338
    %v2026 = vunpack.c.l.b16 %v1339
    %v2027 = vunpack.c.h.b16 %v1339
    %v2028 = vunpack.c.l.b16 %v1340
    %v2029 = vunpack.c.h.b16 %v1340
    %v2030 = vunpack.c.l.b16 %v1341
    %v2031 = vunpack.c.h.b16 %v1341
    %v2032 = vunpack.c.l.b16 %v1342
    %v2033 = vunpack.c.l.b16 %v1343
    %v2034 = vunpack.c.h.b16 %v1343
    %v2035 = vunpack.c.l.b16 %v1344
    %v2036 = vunpack.c.h.b16 %v1344
    %v2037 = vunpack.c.l.b16 %v1345
    %v2038 = vunpack.c.h.b16 %v1345
    %v2039 = vunpack.c.l.b16 %v1346
    %v2040 = vunpack.c.l.b16 %v1347
    %v2041 = vunpack.c.h.b16 %v1347
    %v2042 = vunpack.c.l.b16 %v1348
    %v2043 = vunpack.c.h.b16 %v1348
    %v2044 = vunpack.c.l.b16 %v1349
    %v2045 = vunpack.c.h.b16 %v1349
    %v2046 = vunpack.c.l.b16 %v1350
    %v2047 = vunpack.c.l.b16 %v1351
    %v2048 = vunpack.c.h.b16 %v1351
    %v2049 = vunpack.c.l.b16 %v1352
    %v2050 = vunpack.c.h.b16 %v1352
    %v2051 = vunpack.c.l.b16 %v1353
    %v2052 = vunpack.c.h.b16 %v1353
    %v2053 = vunpack.c.l.b16 %v1354
    %v2054 = vunpack.c.l.b16 %v1355
    %v2055 = vunpack.c.h.b16 %v1355
    %v2056 = vunpack.c.l.b16 %v1356
    %v2057 = vunpack.c.h.b16 %v1356
    %v2058 = vunpack.c.l.b16 %v1357
    %v2059 = vunpack.c.h.b16 %v1357
    %v2060 = vunpack.c.l.b16 %v1358
    %v2061 = vunpack.c.l.b16 %v1359
    %v2062 = vunpack.c.h.b16 %v1359
    %v2063 = vunpack.c.l.b16 %v1360
    %v2064 = vunpack.c.h.b16 %v1360
    %v2065 = vunpack.c.l.b16 %v1361
    %v2066 = vunpack.c.h.b16 %v1361
    %v2067 = vunpack.c.l.b16 %v1362
    %v2068 = vunpack.c.l.b16 %v1363
    %v2069 = vunpack.c.h.b16 %v1363
    %v2070 = vunpack.c.l.b16 %v1364
    %v2071 = vunpack.c.h.b16 %v1364
    %v2072 = vunpack.c.l.b16 %v1365
    %v2073 = vunpack.c.h.b16 %v1365
    %v2074 = vunpack.c.l.b16 %v1366
    %v2075 = vunpack.c.l.b16 %v1367
    %v2076 = vunpack.c.h.b16 %v1367
    %v2077 = vunpack.c.l.b16 %v1368
    %v2078 = vunpack.c.h.b16 %v1368
    %v2079 = vunpack.c.l.b16 %v1369
    %v2080 = vunpack.c.h.b16 %v1369
    %v2081 = vunpack.c.l.b16 %v1370
    %v2082 = vunpack.c.l.b16 %v1371
    %v2083 = vunpack.c.h.b16 %v1371
    %v2084 = vunpack.c.l.b16 %v1372
    %v2085 = vunpack.c.h.b16 %v1372
    %v2086 = vunpack.c.l.b16 %v1373
    %v2087 = vunpack.c.h.b16 %v1373
    %v2088 = vunpack.c.l.b16 %v1374
    %v2089 = vunpack.c.l.b16 %v1375
    %v2090 = vunpack.c.h.b16 %v1375
    %v2091 = vunpack.c.l.b16 %v1376
    %v2092 = vunpack.c.h.b16 %v1376
    %v2093 = vunpack.c.l.b16 %v1377
    %v2094 = vunpack.c.h.b16 %v1377
    %v2095 = vunpack.c.l.b16 %v1378
    %v2096 = vunpack.c.l.b16 %v1379
    %v2097 = vunpack.c.h.b16 %v1379
    %v2098 = vunpack.c.l.b16 %v1380
    %v2099 = vunpack.c.h.b16 %v1380
    %v2100 = vunpack.c.l.b16 %v1381
    %v2101 = vunpack.c.h.b16 %v1381
    %v2102 = vunpack.c.l.b16 %v1382
    %v2103 = vunpack.c.l.b16 %v1383
    %v2104 = vunpack.c.h.b16 %v1383
    %v2105 = vunpack.c.l.b16 %v1384
    %v2106 = vunpack.c.h.b16 %v1384
    %v2107 = vunpack.c.l.b16 %v1385
    %v2108 = vunpack.c.h.b16 %v1385
    %v2109 = vunpack.c.l.b16 %v1386
    %v2110 = vunpack.c.l.b16 %v1387
    %v2111 = vunpack.c.h.b16 %v1387
    %v2112 = vunpack.c.l.b16 %v1388
    %v2113 = vunpack.c.h.b16 %v1388
    %v2114 = vunpack.c.l.b16 %v1389
    %v2115 = vunpack.c.h.b16 %v1389
    %v2116 = vunpack.c.l.b16 %v1390
    %v2117 = vunpack.c.l.b16 %v1391
    %v2118 = vunpack.c.h.b16 %v1391
    %v2119 = vunpack.c.l.b16 %v1392
    %v2120 = vunpack.c.h.b16 %v1392
    %v2121 = vunpack.c.l.b16 %v1393
    %v2122 = vunpack.c.h.b16 %v1393
    %v2123 = vunpack.c.l.b16 %v1394
    %v2124 = vunpack.c.l.b16 %v1395
    %v2125 = vunpack.c.h.b16 %v1395
    %v2126 = vunpack.c.l.b16 %v1396
    %v2127 = vunpack.c.h.b16 %v1396
    %v2128 = vunpack.c.l.b16 %v1397
    %v2129 = vunpack.c.h.b16 %v1397
    %v2130 = vunpack.c.l.b16 %v1398
    %v2131 = vunpack.c.l.b16 %v1399
    %v2132 = vunpack.c.h.b16 %v1399
    %v2133 = vunpack.c.l.b16 %v1400
    %v2134 = vunpack.c.h.b16 %v1400
    %v2135 = vunpack.c.l.b16 %v1401
    %v2136 = vunpack.c.h.b16 %v1401
    %v2137 = vunpack.c.l.b16 %v1402
    %v2138 = vunpack.c.l.b16 %v1403
    %v2139 = vunpack.c.h.b16 %v1403
    %v2140 = vunpack.c.l.b16 %v1404
    %v2141 = vunpack.c.h.b16 %v1404
    %v2142 = vunpack.c.l.b16 %v1405
    %v2143 = vunpack.c.h.b16 %v1405
    %v2144 = vunpack.c.l.b16 %v1406
    %v2145 = vunpack.c.l.b16 %v1407
    %v2146 = vunpack.c.h.b16 %v1407
    %v2147 = vunpack.c.l.b16 %v1408
    %v2148 = vunpack.c.h.b16 %v1408
    %v2149 = vunpack.c.l.b16 %v1409
    %v2150 = vunpack.c.h.b16 %v1409
    %v2151 = vunpack.c.l.b16 %v1410
    %v2152 = vpack.c.b16 %v1711, %v1704
    %v2153 = vpack.c.b16 %v1712, %v1705
    %v2154 = vpack.c.b16 %v1713, %v1706
    %v2155 = vpack.c.b16 %v1714, %v1707
    %v2156 = vpack.c.b16 %v1715, %v1708
    %v2157 = vpack.c.b16 %v1716, %v1709
    %v2158 = vpack.c.b16 %v1717, %v1710
    %v2159 = vpack.c.b16 %v1725, %v1718
    %v2160 = vpack.c.b16 %v1726, %v1719
    %v2161 = vpack.c.b16 %v1727, %v1720
    %v2162 = vpack.c.b16 %v1728, %v1721
    %v2163 = vpack.c.b16 %v1729, %v1722
    %v2164 = vpack.c.b16 %v1730, %v1723
    %v2165 = vpack.c.b16 %v1731, %v1724
    %v2166 = vpack.c.b16 %v1739, %v1732
    %v2167 = vpack.c.b16 %v1740, %v1733
    %v2168 = vpack.c.b16 %v1741, %v1734
    %v2169 = vpack.c.b16 %v1742, %v1735
    %v2170 = vpack.c.b16 %v1743, %v1736
    %v2171 = vpack.c.b16 %v1744, %v1737
    %v2172 = vpack.c.b16 %v1745, %v1738
    %v2173 = vpack.c.b16 %v1753, %v1746
    %v2174 = vpack.c.b16 %v1754, %v1747
    %v2175 = vpack.c.b16 %v1755, %v1748
    %v2176 = vpack.c.b16 %v1756, %v1749
    %v2177 = vpack.c.b16 %v1757, %v1750
    %v2178 = vpack.c.b16 %v1758, %v1751
    %v2179 = vpack.c.b16 %v1759, %v1752
    %v2180 = vpack.c.b16 %v1767, %v1760
    %v2181 = vpack.c.b16 %v1768, %v1761
    %v2182 = vpack.c.b16 %v1769, %v1762
    %v2183 = vpack.c.b16 %v1770, %v1763
    %v2184 = vpack.c.b16 %v1771, %v1764
    %v2185 = vpack.c.b16 %v1772, %v1765
    %v2186 = vpack.c.b16 %v1773, %v1766
    %v2187 = vpack.c.b16 %v1781, %v1774
    %v2188 = vpack.c.b16 %v1782, %v1775
    %v2189 = vpack.c.b16 %v1783, %v1776
    %v2190 = vpack.c.b16 %v1784, %v1777
    %v2191 = vpack.c.b16 %v1785, %v1778
    %v2192 = vpack.c.b16 %v1786, %v1779
    %v2193 = vpack.c.b16 %v1787, %v1780
    %v2194 = vpack.c.b16 %v1795, %v1788
    %v2195 = vpack.c.b16 %v1796, %v1789
    %v2196 = vpack.c.b16 %v1797, %v1790
    %v2197 = vpack.c.b16 %v1798, %v1791
    %v2198 = vpack.c.b16 %v1799, %v1792
    %v2199 = vpack.c.b16 %v1800, %v1793
    %v2200 = vpack.c.b16 %v1801, %v1794
    %v2201 = vpack.c.b16 %v1809, %v1802
    %v2202 = vpack.c.b16 %v1810, %v1803
    %v2203 = vpack.c.b16 %v1811, %v1804
    %v2204 = vpack.c.b16 %v1812, %v1805
    %v2205 = vpack.c.b16 %v1813, %v1806
    %v2206 = vpack.c.b16 %v1814, %v1807
    %v2207 = vpack.c.b16 %v1815, %v1808
    %v2208 = vpack.c.b16 %v1823, %v1816
    %v2209 = vpack.c.b16 %v1824, %v1817
    %v2210 = vpack.c.b16 %v1825, %v1818
    %v2211 = vpack.c.b16 %v1826, %v1819
    %v2212 = vpack.c.b16 %v1827, %v1820
    %v2213 = vpack.c.b16 %v1828, %v1821
    %v2214 = vpack.c.b16 %v1829, %v1822
    %v2215 = vpack.c.b16 %v1837, %v1830
    %v2216 = vpack.c.b16 %v1838, %v1831
    %v2217 = vpack.c.b16 %v1839, %v1832
    %v2218 = vpack.c.b16 %v1840, %v1833
    %v2219 = vpack.c.b16 %v1841, %v1834
    %v2220 = vpack.c.b16 %v1842, %v1835
    %v2221 = vpack.c.b16 %v1843, %v1836
    %v2222 = vpack.c.b16 %v1851, %v1844
    %v2223 = vpack.c.b16 %v1852, %v1845
    %v2224 = vpack.c.b16 %v1853, %v1846
    %v2225 = vpack.c.b16 %v1854, %v1847
    %v2226 = vpack.c.b16 %v1855, %v1848
    %v2227 = vpack.c.b16 %v1856, %v1849
    %v2228 = vpack.c.b16 %v1857, %v1850
    %v2229 = vpack.c.b16 %v1865, %v1858
    %v2230 = vpack.c.b16 %v1866, %v1859
    %v2231 = vpack.c.b16 %v1867, %v1860
    %v2232 = vpack.c.b16 %v1868, %v1861
    %v2233 = vpack.c.b16 %v1869, %v1862
    %v2234 = vpack.c.b16 %v1870, %v1863
    %v2235 = vpack.c.b16 %v1871, %v1864
    %v2236 = vpack.c.b16 %v1879, %v1872
    %v2237 = vpack.c.b16 %v1880, %v1873
    %v2238 = vpack.c.b16 %v1881, %v1874
    %v2239 = vpack.c.b16 %v1882, %v1875
    %v2240 = vpack.c.b16 %v1883, %v1876
    %v2241 = vpack.c.b16 %v1884, %v1877
    %v2242 = vpack.c.b16 %v1885, %v1878
    %v2243 = vpack.c.b16 %v1893, %v1886
    %v2244 = vpack.c.b16 %v1894, %v1887
    %v2245 = vpack.c.b16 %v1895, %v1888
    %v2246 = vpack.c.b16 %v1896, %v1889
    %v2247 = vpack.c.b16 %v1897, %v1890
    %v2248 = vpack.c.b16 %v1898, %v1891
    %v2249 = vpack.c.b16 %v1899, %v1892
    %v2250 = vpack.c.b16 %v1907, %v1900
    %v2251 = vpack.c.b16 %v1908, %v1901
    %v2252 = vpack.c.b16 %v1909, %v1902
    %v2253 = vpack.c.b16 %v1910, %v1903
    %v2254 = vpack.c.b16 %v1911, %v1904
    %v2255 = vpack.c.b16 %v1912, %v1905
    %v2256 = vpack.c.b16 %v1913, %v1906
    %v2257 = vpack.c.b16 %v1921, %v1914
    %v2258 = vpack.c.b16 %v1922, %v1915
    %v2259 = vpack.c.b16 %v1923, %v1916
    %v2260 = vpack.c.b16 %v1924, %v1917
    %v2261 = vpack.c.b16 %v1925, %v1918
    %v2262 = vpack.c.b16 %v1926, %v1919
    %v2263 = vpack.c.b16 %v1927, %v1920
    %v2264 = vpack.c.b16 %v1935, %v1928
    %v2265 = vpack.c.b16 %v1936, %v1929
    %v2266 = vpack.c.b16 %v1937, %v1930
    %v2267 = vpack.c.b16 %v1938, %v1931
    %v2268 = vpack.c.b16 %v1939, %v1932
    %v2269 = vpack.c.b16 %v1940, %v1933
    %v2270 = vpack.c.b16 %v1941, %v1934
    %v2271 = vpack.c.b16 %v1949, %v1942
    %v2272 = vpack.c.b16 %v1950, %v1943
    %v2273 = vpack.c.b16 %v1951, %v1944
    %v2274 = vpack.c.b16 %v1952, %v1945
    %v2275 = vpack.c.b16 %v1953, %v1946
    %v2276 = vpack.c.b16 %v1954, %v1947
    %v2277 = vpack.c.b16 %v1955, %v1948
    %v2278 = vpack.c.b16 %v1963, %v1956
    %v2279 = vpack.c.b16 %v1964, %v1957
    %v2280 = vpack.c.b16 %v1965, %v1958
    %v2281 = vpack.c.b16 %v1966, %v1959
    %v2282 = vpack.c.b16 %v1967, %v1960
    %v2283 = vpack.c.b16 %v1968, %v1961
    %v2284 = vpack.c.b16 %v1969, %v1962
    %v2285 = vpack.c.b16 %v1977, %v1970
    %v2286 = vpack.c.b16 %v1978, %v1971
    %v2287 = vpack.c.b16 %v1979, %v1972
    %v2288 = vpack.c.b16 %v1980, %v1973
    %v2289 = vpack.c.b16 %v1981, %v1974
    %v2290 = vpack.c.b16 %v1982, %v1975
    %v2291 = vpack.c.b16 %v1983, %v1976
    %v2292 = vpack.c.b16 %v1991, %v1984
    %v2293 = vpack.c.b16 %v1992, %v1985
    %v2294 = vpack.c.b16 %v1993, %v1986
    %v2295 = vpack.c.b16 %v1994, %v1987
    %v2296 = vpack.c.b16 %v1995, %v1988
    %v2297 = vpack.c.b16 %v1996, %v1989
    %v2298 = vpack.c.b16 %v1997, %v1990
    %v2299 = vpack.c.b16 %v2005, %v1998
    %v2300 = vpack.c.b16 %v2006, %v1999
    %v2301 = vpack.c.b16 %v2007, %v2000
    %v2302 = vpack.c.b16 %v2008, %v2001
    %v2303 = vpack.c.b16 %v2009, %v2002
    %v2304 = vpack.c.b16 %v2010, %v2003
    %v2305 = vpack.c.b16 %v2011, %v2004
    %v2306 = vpack.c.b16 %v2019, %v2012
    %v2307 = vpack.c.b16 %v2020, %v2013
    %v2308 = vpack.c.b16 %v2021, %v2014
    %v2309 = vpack.c.b16 %v2022, %v2015
    %v2310 = vpack.c.b16 %v2023, %v2016
    %v2311 = vpack.c.b16 %v2024, %v2017
    %v2312 = vpack.c.b16 %v2025, %v2018
    %v2313 = vpack.c.b16 %v2033, %v2026
    %v2314 = vpack.c.b16 %v2034, %v2027
    %v2315 = vpack.c.b16 %v2035, %v2028
    %v2316 = vpack.c.b16 %v2036, %v2029
    %v2317 = vpack.c.b16 %v2037, %v2030
    %v2318 = vpack.c.b16 %v2038, %v2031
    %v2319 = vpack.c.b16 %v2039, %v2032
    %v2320 = vpack.c.b16 %v2047, %v2040
    %v2321 = vpack.c.b16 %v2048, %v2041
    %v2322 = vpack.c.b16 %v2049, %v2042
    %v2323 = vpack.c.b16 %v2050, %v2043
    %v2324 = vpack.c.b16 %v2051, %v2044
    %v2325 = vpack.c.b16 %v2052, %v2045
    %v2326 = vpack.c.b16 %v2053, %v2046
    %v2327 = vpack.c.b16 %v2061, %v2054
    %v2328 = vpack.c.b16 %v2062, %v2055
    %v2329 = vpack.c.b16 %v2063, %v2056
    %v2330 = vpack.c.b16 %v2064, %v2057
    %v2331 = vpack.c.b16 %v2065, %v2058
    %v2332 = vpack.c.b16 %v2066, %v2059
    %v2333 = vpack.c.b16 %v2067, %v2060
    %v2334 = vpack.c.b16 %v2075, %v2068
    %v2335 = vpack.c.b16 %v2076, %v2069
    %v2336 = vpack.c.b16 %v2077, %v2070
    %v2337 = vpack.c.b16 %v2078, %v2071
    %v2338 = vpack.c.b16 %v2079, %v2072
    %v2339 = vpack.c.b16 %v2080, %v2073
    %v2340 = vpack.c.b16 %v2081, %v2074
    %v2341 = vpack.c.b16 %v2089, %v2082
    %v2342 = vpack.c.b16 %v2090, %v2083
    %v2343 = vpack.c.b16 %v2091, %v2084
    %v2344 = vpack.c.b16 %v2092, %v2085
    %v2345 = vpack.c.b16 %v2093, %v2086
    %v2346 = vpack.c.b16 %v2094, %v2087
    %v2347 = vpack.c.b16 %v2095, %v2088
    %v2348 = vpack.c.b16 %v2103, %v2096
    %v2349 = vpack.c.b16 %v2104, %v2097
    %v2350 = vpack.c.b16 %v2105, %v2098
    %v2351 = vpack.c.b16 %v2106, %v2099
    %v2352 = vpack.c.b16 %v2107, %v2100
    %v2353 = vpack.c.b16 %v2108, %v2101
    %v2354 = vpack.c.b16 %v2109, %v2102
    %v2355 = vpack.c.b16 %v2117, %v2110
    %v2356 = vpack.c.b16 %v2118, %v2111
    %v2357 = vpack.c.b16 %v2119, %v2112
    %v2358 = vpack.c.b16 %v2120, %v2113
    %v2359 = vpack.c.b16 %v2121, %v2114
    %v2360 = vpack.c.b16 %v2122, %v2115
    %v2361 = vpack.c.b16 %v2123, %v2116
    %v2362 = vpack.c.b16 %v2131, %v2124
    %v2363 = vpack.c.b16 %v2132, %v2125
    %v2364 = vpack.c.b16 %v2133, %v2126
    %v2365 = vpack.c.b16 %v2134, %v2127
    %v2366 = vpack.c.b16 %v2135, %v2128
    %v2367 = vpack.c.b16 %v2136, %v2129
    %v2368 = vpack.c.b16 %v2137, %v2130
    %v2369 = vpack.c.b16 %v2145, %v2138
    %v2370 = vpack.c.b16 %v2146, %v2139
    %v2371 = vpack.c.b16 %v2147, %v2140
    %v2372 = vpack.c.b16 %v2148, %v2141
    %v2373 = vpack.c.b16 %v2149, %v2142
    %v2374 = vpack.c.b16 %v2150, %v2143
    %v2375 = vpack.c.b16 %v2151, %v2144
    %2600 = vmatprep.subr.bf16.mxu0 %v2202
    %2601 = vmatpush1.bf16.msra.mxu0 %v2201
    %2602 = vmatprep.subr.bf16.mxu0 %v2195
    %2603 = vmatpush1.bf16.msra.mxu0 %v2194
    %2604 = vmatprep.subr.bf16.mxu0 %v2188
    %2605 = vmatpush1.bf16.msra.mxu0 %v2187
    %2606 = vmatprep.subr.bf16.mxu0 %v2181
    %2607 = vmatpush1.bf16.msra.mxu0 %v2180
    %2608 = vmatprep.subr.bf16.mxu0 %v2174
    %2609 = vmatpush1.bf16.msra.mxu0 %v2173
    %2610 = vmatprep.subr.bf16.mxu0 %v2167
    %2611 = vmatpush1.bf16.msra.mxu0 %v2166
    %2612 = vmatprep.subr.bf16.mxu0 %v2160
    %2613 = vmatpush1.bf16.msra.mxu0 %v2159
    %2614 = vmatprep.subr.bf16.mxu0 %v2153
    %2615 = vmatpush1.bf16.msra.mxu0 %v2152
    %2616 = vmatprep.subr.bf16.mxu0 %v2258
    %2617 = vmatpush2.bf16.msra.mxu0 %v2257
    %2618 = vmatprep.subr.bf16.mxu0 %v2251
    %2619 = vmatpush2.bf16.msra.mxu0 %v2250
    %2620 = vmatprep.subr.bf16.mxu0 %v2244
    %2621 = vmatpush2.bf16.msra.mxu0 %v2243
    %2622 = vmatprep.subr.bf16.mxu0 %v2237
    %2623 = vmatpush2.bf16.msra.mxu0 %v2236
    %2624 = vmatprep.subr.bf16.mxu0 %v2230
    %2625 = vmatpush2.bf16.msra.mxu0 %v2229
    %2626 = vmatprep.subr.bf16.mxu0 %v2223
    %2627 = vmatpush2.bf16.msra.mxu0 %v2222
    %2628 = vmatprep.subr.bf16.mxu0 %v2216
    %2629 = vmatpush2.bf16.msra.mxu0 %v2215
    %2630 = vmatprep.subr.bf16.mxu0 %v2209
    %2631 = vmatpush2.bf16.msra.mxu0 %v2208
    %2632 = vmatprep.mubr.bf16.mxu0 %v1152
    %2633 = vmatmul.mubr.bf16.gmra.mxu0 %v1151
    %v2634 = vpop.f32.mrf.mxu0
    %v2635 = vadd.f32 %v1416, %v2634
    %v2636 = vpop.f32.mrf.mxu0
    %v2637 = vadd.f32 %v1420, %v2636
    %v2638 = vpop.f32.mrf.mxu0
    %v2639 = vpop.f32.mrf.mxu0
    %2640 = vdwg.mxu0
    %2641 = vmatprep.subr.bf16.mxu0 %v2314
    %2642 = vmatpush1.bf16.msra.mxu0 %v2313
    %2643 = vmatprep.subr.bf16.mxu0 %v2307
    %2644 = vmatpush1.bf16.msra.mxu0 %v2306
    %2645 = vmatprep.subr.bf16.mxu0 %v2300
    %2646 = vmatpush1.bf16.msra.mxu0 %v2299
    %2647 = vmatprep.subr.bf16.mxu0 %v2293
    %2648 = vmatpush1.bf16.msra.mxu0 %v2292
    %2649 = vmatprep.subr.bf16.mxu0 %v2286
    %2650 = vmatpush1.bf16.msra.mxu0 %v2285
    %2651 = vmatprep.subr.bf16.mxu0 %v2279
    %2652 = vmatpush1.bf16.msra.mxu0 %v2278
    %2653 = vmatprep.subr.bf16.mxu0 %v2272
    %2654 = vmatpush1.bf16.msra.mxu0 %v2271
    %2655 = vmatprep.subr.bf16.mxu0 %v2265
    %2656 = vmatpush1.bf16.msra.mxu0 %v2264
    %2657 = vmatprep.subr.bf16.mxu0 %v2370
    %2658 = vmatpush2.bf16.msra.mxu0 %v2369
    %2659 = vmatprep.subr.bf16.mxu0 %v2363
    %2660 = vmatpush2.bf16.msra.mxu0 %v2362
    %2661 = vmatprep.subr.bf16.mxu0 %v2356
    %2662 = vmatpush2.bf16.msra.mxu0 %v2355
    %2663 = vmatprep.subr.bf16.mxu0 %v2349
    %2664 = vmatpush2.bf16.msra.mxu0 %v2348
    %2665 = vmatprep.subr.bf16.mxu0 %v2342
    %2666 = vmatpush2.bf16.msra.mxu0 %v2341
    %2667 = vmatprep.subr.bf16.mxu0 %v2335
    %2668 = vmatpush2.bf16.msra.mxu0 %v2334
    %2669 = vmatprep.subr.bf16.mxu0 %v2328
    %2670 = vmatpush2.bf16.msra.mxu0 %v2327
    %2671 = vmatprep.subr.bf16.mxu0 %v2321
    %2672 = vmatpush2.bf16.msra.mxu0 %v2320
    %2673 = vmatprep.mubr.bf16.mxu0 %v1154
    %2674 = vmatmul.mubr.bf16.gmra.mxu0 %v1153
    %v2675 = vpop.f32.mrf.mxu0
    %v2676 = vadd.f32 %v2635, %v2675
    %v2677 = vpop.f32.mrf.mxu0
    %v2678 = vadd.f32 %v2637, %v2677
    %v2679 = vpop.f32.mrf.mxu0
    %v2680 = vpop.f32.mrf.mxu0
    %2681 = vdwg.mxu0
    %2682 = vmatprep.subr.bf16.mxu0 %v2204
    %2683 = vmatpush1.bf16.msra.mxu0 %v2203
    %2684 = vmatprep.subr.bf16.mxu0 %v2197
    %2685 = vmatpush1.bf16.msra.mxu0 %v2196
    %2686 = vmatprep.subr.bf16.mxu0 %v2190
    %2687 = vmatpush1.bf16.msra.mxu0 %v2189
    %2688 = vmatprep.subr.bf16.mxu0 %v2183
    %2689 = vmatpush1.bf16.msra.mxu0 %v2182
    %2690 = vmatprep.subr.bf16.mxu0 %v2176
    %2691 = vmatpush1.bf16.msra.mxu0 %v2175
    %2692 = vmatprep.subr.bf16.mxu0 %v2169
    %2693 = vmatpush1.bf16.msra.mxu0 %v2168
    %2694 = vmatprep.subr.bf16.mxu0 %v2162
    %2695 = vmatpush1.bf16.msra.mxu0 %v2161
    %2696 = vmatprep.subr.bf16.mxu0 %v2155
    %2697 = vmatpush1.bf16.msra.mxu0 %v2154
    %2698 = vmatprep.subr.bf16.mxu0 %v2260
    %2699 = vmatpush2.bf16.msra.mxu0 %v2259
    %2700 = vmatprep.subr.bf16.mxu0 %v2253
    %2701 = vmatpush2.bf16.msra.mxu0 %v2252
    %2702 = vmatprep.subr.bf16.mxu0 %v2246
    %2703 = vmatpush2.bf16.msra.mxu0 %v2245
    %2704 = vmatprep.subr.bf16.mxu0 %v2239
    %2705 = vmatpush2.bf16.msra.mxu0 %v2238
    %2706 = vmatprep.subr.bf16.mxu0 %v2232
    %2707 = vmatpush2.bf16.msra.mxu0 %v2231
    %2708 = vmatprep.subr.bf16.mxu0 %v2225
    %2709 = vmatpush2.bf16.msra.mxu0 %v2224
    %2710 = vmatprep.subr.bf16.mxu0 %v2218
    %2711 = vmatpush2.bf16.msra.mxu0 %v2217
    %2712 = vmatprep.subr.bf16.mxu0 %v2211
    %2713 = vmatpush2.bf16.msra.mxu0 %v2210
    %2714 = vmatprep.mubr.bf16.mxu0 %v1152
    %2715 = vmatmul.mubr.bf16.gmra.mxu0 %v1151
    %v2716 = vpop.f32.mrf.mxu0
    %v2717 = vadd.f32 %v1424, %v2716
    %v2718 = vpop.f32.mrf.mxu0
    %v2719 = vadd.f32 %v1428, %v2718
    %v2720 = vpop.f32.mrf.mxu0
    %v2721 = vpop.f32.mrf.mxu0
    %2722 = vdwg.mxu0
    %2723 = vmatprep.subr.bf16.mxu0 %v2316
    %2724 = vmatpush1.bf16.msra.mxu0 %v2315
    %2725 = vmatprep.subr.bf16.mxu0 %v2309
    %2726 = vmatpush1.bf16.msra.mxu0 %v2308
    %2727 = vmatprep.subr.bf16.mxu0 %v2302
    %2728 = vmatpush1.bf16.msra.mxu0 %v2301
    %2729 = vmatprep.subr.bf16.mxu0 %v2295
    %2730 = vmatpush1.bf16.msra.mxu0 %v2294
    %2731 = vmatprep.subr.bf16.mxu0 %v2288
    %2732 = vmatpush1.bf16.msra.mxu0 %v2287
    %2733 = vmatprep.subr.bf16.mxu0 %v2281
    %2734 = vmatpush1.bf16.msra.mxu0 %v2280
    %2735 = vmatprep.subr.bf16.mxu0 %v2274
    %2736 = vmatpush1.bf16.msra.mxu0 %v2273
    %2737 = vmatprep.subr.bf16.mxu0 %v2267
    %2738 = vmatpush1.bf16.msra.mxu0 %v2266
    %2739 = vmatprep.subr.bf16.mxu0 %v2372
    %2740 = vmatpush2.bf16.msra.mxu0 %v2371
    %2741 = vmatprep.subr.bf16.mxu0 %v2365
    %2742 = vmatpush2.bf16.msra.mxu0 %v2364
    %2743 = vmatprep.subr.bf16.mxu0 %v2358
    %2744 = vmatpush2.bf16.msra.mxu0 %v2357
    %2745 = vmatprep.subr.bf16.mxu0 %v2351
    %2746 = vmatpush2.bf16.msra.mxu0 %v2350
    %2747 = vmatprep.subr.bf16.mxu0 %v2344
    %2748 = vmatpush2.bf16.msra.mxu0 %v2343
    %2749 = vmatprep.subr.bf16.mxu0 %v2337
    %2750 = vmatpush2.bf16.msra.mxu0 %v2336
    %2751 = vmatprep.subr.bf16.mxu0 %v2330
    %2752 = vmatpush2.bf16.msra.mxu0 %v2329
    %2753 = vmatprep.subr.bf16.mxu0 %v2323
    %2754 = vmatpush2.bf16.msra.mxu0 %v2322
    %2755 = vmatprep.mubr.bf16.mxu0 %v1154
    %2756 = vmatmul.mubr.bf16.gmra.mxu0 %v1153
    %v2757 = vpop.f32.mrf.mxu0
    %v2758 = vadd.f32 %v2717, %v2757
    %v2759 = vpop.f32.mrf.mxu0
    %v2760 = vadd.f32 %v2719, %v2759
    %v2761 = vpop.f32.mrf.mxu0
    %v2762 = vpop.f32.mrf.mxu0
    %2763 = vdwg.mxu0
    %2764 = vmatprep.subr.bf16.mxu0 %v2206
    %2765 = vmatpush1.bf16.msra.mxu0 %v2205
    %2766 = vmatprep.subr.bf16.mxu0 %v2199
    %2767 = vmatpush1.bf16.msra.mxu0 %v2198
    %2768 = vmatprep.subr.bf16.mxu0 %v2192
    %2769 = vmatpush1.bf16.msra.mxu0 %v2191
    %2770 = vmatprep.subr.bf16.mxu0 %v2185
    %2771 = vmatpush1.bf16.msra.mxu0 %v2184
    %2772 = vmatprep.subr.bf16.mxu0 %v2178
    %2773 = vmatpush1.bf16.msra.mxu0 %v2177
    %2774 = vmatprep.subr.bf16.mxu0 %v2171
    %2775 = vmatpush1.bf16.msra.mxu0 %v2170
    %2776 = vmatprep.subr.bf16.mxu0 %v2164
    %2777 = vmatpush1.bf16.msra.mxu0 %v2163
    %2778 = vmatprep.subr.bf16.mxu0 %v2157
    %2779 = vmatpush1.bf16.msra.mxu0 %v2156
    %2780 = vmatprep.subr.bf16.mxu0 %v2262
    %2781 = vmatpush2.bf16.msra.mxu0 %v2261
    %2782 = vmatprep.subr.bf16.mxu0 %v2255
    %2783 = vmatpush2.bf16.msra.mxu0 %v2254
    %2784 = vmatprep.subr.bf16.mxu0 %v2248
    %2785 = vmatpush2.bf16.msra.mxu0 %v2247
    %2786 = vmatprep.subr.bf16.mxu0 %v2241
    %2787 = vmatpush2.bf16.msra.mxu0 %v2240
    %2788 = vmatprep.subr.bf16.mxu0 %v2234
    %2789 = vmatpush2.bf16.msra.mxu0 %v2233
    %2790 = vmatprep.subr.bf16.mxu0 %v2227
    %2791 = vmatpush2.bf16.msra.mxu0 %v2226
    %2792 = vmatprep.subr.bf16.mxu0 %v2220
    %2793 = vmatpush2.bf16.msra.mxu0 %v2219
    %2794 = vmatprep.subr.bf16.mxu0 %v2213
    %2795 = vmatpush2.bf16.msra.mxu0 %v2212
    %2796 = vmatprep.mubr.bf16.mxu0 %v1152
    %2797 = vmatmul.mubr.bf16.gmra.mxu0 %v1151
    %v2798 = vpop.f32.mrf.mxu0
    %v2799 = vadd.f32 %v1432, %v2798
    %v2800 = vpop.f32.mrf.mxu0
    %v2801 = vadd.f32 %v1436, %v2800
    %v2802 = vpop.f32.mrf.mxu0
    %v2803 = vpop.f32.mrf.mxu0
    %2804 = vdwg.mxu0
    %2805 = vmatprep.subr.bf16.mxu0 %v2318
    %2806 = vmatpush1.bf16.msra.mxu0 %v2317
    %2807 = vmatprep.subr.bf16.mxu0 %v2311
    %2808 = vmatpush1.bf16.msra.mxu0 %v2310
    %2809 = vmatprep.subr.bf16.mxu0 %v2304
    %2810 = vmatpush1.bf16.msra.mxu0 %v2303
    %2811 = vmatprep.subr.bf16.mxu0 %v2297
    %2812 = vmatpush1.bf16.msra.mxu0 %v2296
    %2813 = vmatprep.subr.bf16.mxu0 %v2290
    %2814 = vmatpush1.bf16.msra.mxu0 %v2289
    %2815 = vmatprep.subr.bf16.mxu0 %v2283
    %2816 = vmatpush1.bf16.msra.mxu0 %v2282
    %2817 = vmatprep.subr.bf16.mxu0 %v2276
    %2818 = vmatpush1.bf16.msra.mxu0 %v2275
    %2819 = vmatprep.subr.bf16.mxu0 %v2269
    %2820 = vmatpush1.bf16.msra.mxu0 %v2268
    %2821 = vmatprep.subr.bf16.mxu0 %v2374
    %2822 = vmatpush2.bf16.msra.mxu0 %v2373
    %2823 = vmatprep.subr.bf16.mxu0 %v2367
    %2824 = vmatpush2.bf16.msra.mxu0 %v2366
    %2825 = vmatprep.subr.bf16.mxu0 %v2360
    %2826 = vmatpush2.bf16.msra.mxu0 %v2359
    %2827 = vmatprep.subr.bf16.mxu0 %v2353
    %2828 = vmatpush2.bf16.msra.mxu0 %v2352
    %2829 = vmatprep.subr.bf16.mxu0 %v2346
    %2830 = vmatpush2.bf16.msra.mxu0 %v2345
    %2831 = vmatprep.subr.bf16.mxu0 %v2339
    %2832 = vmatpush2.bf16.msra.mxu0 %v2338
    %2833 = vmatprep.subr.bf16.mxu0 %v2332
    %2834 = vmatpush2.bf16.msra.mxu0 %v2331
    %2835 = vmatprep.subr.bf16.mxu0 %v2325
    %2836 = vmatpush2.bf16.msra.mxu0 %v2324
    %2837 = vmatprep.mubr.bf16.mxu0 %v1154
    %2838 = vmatmul.mubr.bf16.gmra.mxu0 %v1153
    %v2839 = vpop.f32.mrf.mxu0
    %v2840 = vadd.f32 %v2799, %v2839
    %v2841 = vpop.f32.mrf.mxu0
    %v2842 = vadd.f32 %v2801, %v2841
    %v2843 = vpop.f32.mrf.mxu0
    %v2844 = vpop.f32.mrf.mxu0
    %2845 = vdwg.mxu0
    %2846 = vmatprep.subr.bf16.mxu0 0
    %2847 = vmatpush1.bf16.msra.mxu0 %v2207
    %2848 = vmatprep.subr.bf16.mxu0 0
    %2849 = vmatpush1.bf16.msra.mxu0 %v2200
    %2850 = vmatprep.subr.bf16.mxu0 0
    %2851 = vmatpush1.bf16.msra.mxu0 %v2193
    %2852 = vmatprep.subr.bf16.mxu0 0
    %2853 = vmatpush1.bf16.msra.mxu0 %v2186
    %2854 = vmatprep.subr.bf16.mxu0 0
    %2855 = vmatpush1.bf16.msra.mxu0 %v2179
    %2856 = vmatprep.subr.bf16.mxu0 0
    %2857 = vmatpush1.bf16.msra.mxu0 %v2172
    %2858 = vmatprep.subr.bf16.mxu0 0
    %2859 = vmatpush1.bf16.msra.mxu0 %v2165
    %2860 = vmatprep.subr.bf16.mxu0 0
    %2861 = vmatpush1.bf16.msra.mxu0 %v2158
    %2862 = vmatprep.subr.bf16.mxu0 0
    %2863 = vmatpush2.bf16.msra.mxu0 %v2263
    %2864 = vmatprep.subr.bf16.mxu0 0
    %2865 = vmatpush2.bf16.msra.mxu0 %v2256
    %2866 = vmatprep.subr.bf16.mxu0 0
    %2867 = vmatpush2.bf16.msra.mxu0 %v2249
    %2868 = vmatprep.subr.bf16.mxu0 0
    %2869 = vmatpush2.bf16.msra.mxu0 %v2242
    %2870 = vmatprep.subr.bf16.mxu0 0
    %2871 = vmatpush2.bf16.msra.mxu0 %v2235
    %2872 = vmatprep.subr.bf16.mxu0 0
    %2873 = vmatpush2.bf16.msra.mxu0 %v2228
    %2874 = vmatprep.subr.bf16.mxu0 0
    %2875 = vmatpush2.bf16.msra.mxu0 %v2221
    %2876 = vmatprep.subr.bf16.mxu0 0
    %2877 = vmatpush2.bf16.msra.mxu0 %v2214
    %2878 = vmatprep.mubr.bf16.mxu0 %v1152
    %2879 = vmatmul.mubr.bf16.gmra.mxu0 %v1151
    %v2880 = vpop.f32.mrf.mxu0
    %v2881 = vadd.f32 %v1440, %v2880
    %v2882 = vpop.f32.mrf.mxu0
    %v2883 = vpop.f32.mrf.mxu0
    %v2884 = vpop.f32.mrf.mxu0
    %2885 = vdwg.mxu0
    %2886 = vmatprep.subr.bf16.mxu0 0
    %2887 = vmatpush1.bf16.msra.mxu0 %v2319
    %2888 = vmatprep.subr.bf16.mxu0 0
    %2889 = vmatpush1.bf16.msra.mxu0 %v2312
    %2890 = vmatprep.subr.bf16.mxu0 0
    %2891 = vmatpush1.bf16.msra.mxu0 %v2305
    %2892 = vmatprep.subr.bf16.mxu0 0
    %2893 = vmatpush1.bf16.msra.mxu0 %v2298
    %2894 = vmatprep.subr.bf16.mxu0 0
    %2895 = vmatpush1.bf16.msra.mxu0 %v2291
    %2896 = vmatprep.subr.bf16.mxu0 0
    %2897 = vmatpush1.bf16.msra.mxu0 %v2284
    %2898 = vmatprep.subr.bf16.mxu0 0
    %2899 = vmatpush1.bf16.msra.mxu0 %v2277
    %2900 = vmatprep.subr.bf16.mxu0 0
    %2901 = vmatpush1.bf16.msra.mxu0 %v2270
    %2902 = vmatprep.subr.bf16.mxu0 0
    %2903 = vmatpush2.bf16.msra.mxu0 %v2375
    %2904 = vmatprep.subr.bf16.mxu0 0
    %2905 = vmatpush2.bf16.msra.mxu0 %v2368
    %2906 = vmatprep.subr.bf16.mxu0 0
    %2907 = vmatpush2.bf16.msra.mxu0 %v2361
    %2908 = vmatprep.subr.bf16.mxu0 0
    %2909 = vmatpush2.bf16.msra.mxu0 %v2354
    %2910 = vmatprep.subr.bf16.mxu0 0
    %2911 = vmatpush2.bf16.msra.mxu0 %v2347
    %2912 = vmatprep.subr.bf16.mxu0 0
    %2913 = vmatpush2.bf16.msra.mxu0 %v2340
    %2914 = vmatprep.subr.bf16.mxu0 0
    %2915 = vmatpush2.bf16.msra.mxu0 %v2333
    %2916 = vmatprep.subr.bf16.mxu0 0
    %2917 = vmatpush2.bf16.msra.mxu0 %v2326
    %2918 = vmatprep.mubr.bf16.mxu0 %v1154
    %2919 = vmatmul.mubr.bf16.gmra.mxu0 %v1153
    %v2920 = vpop.f32.mrf.mxu0
    %v2921 = vadd.f32 %v2881, %v2920
    %v2922 = vpop.f32.mrf.mxu0
    %v2923 = vpop.f32.mrf.mxu0
    %v2924 = vpop.f32.mrf.mxu0
    %2925 = vdwg.mxu0
    %v2926 = vpack.c.bf16 %v2676, %v2676
    %v2927 = vpack.c.bf16 %v2678, %v2678
    %v2928 = vpack.c.bf16 %v2758, %v2758
    %v2929 = vpack.c.bf16 %v2760, %v2760
    %v2930 = vpack.c.bf16 %v2840, %v2840
    %v2931 = vpack.c.bf16 %v2842, %v2842
    %v2932 = vpack.c.bf16 %v2921, %v2921
    %v2940 = vunpack.c.l.b16 %v2926
    %v2941 = vunpack.c.l.b16 %v2927
    %v2942 = vunpack.c.l.b16 %v2928
    %v2943 = vunpack.c.l.b16 %v2929
    %v2944 = vunpack.c.l.b16 %v2930
    %v2945 = vunpack.c.l.b16 %v2931
    %v2946 = vunpack.c.l.b16 %v2932
    %v2947 = vpack.c.b16 %v2941, %v2940
    %v2948 = vpack.c.b16 %v2943, %v2942
    %v2949 = vpack.c.b16 %v2945, %v2944
    %v2950 = vpack.c.b16 %v2946, %v2946
    %2955 = vst [vmem:[#allocation2] sm:$0xff] %v2947
    %2956 = vst [vmem:[#allocation2 + $0x8] sm:$0xff] %v2948
    %2957 = vst [vmem:[#allocation2 + $0x10] sm:$0xff] %v2949
    %vm2958 = vcmask 125952
    %2959 = vst.msk [vmem:[#allocation2 + $0x18] sm:$0xf] %vm2958, %v2950
    // Predicated region
    $region30: #{tpu_custom_call.1} parent=1 // pred_check
      _
    $region31: #{tpu_custom_call.1} parent=1 // pred_check_branch
      %2961 = sbr.rel (0) target = $region33
    $region32: #{tpu_custom_call.1} parent=1 // pred_region
      %s2963 = ssub.s32 448, 448
      %2964 = vsyncadd [#allocation3], %s2963
      %s2966 = sshll.u32 [#allocation2], 4
      %s2967 = int_to_ptr.vmem [resolvable:$true] %s2966
      %2969 = dma.vmem_to_hbm [thread:$0]  %s2967, 448, %s7, [#allocation3]
    $region33: #{tpu_custom_call.1} parent=1 // pred_fallthru
      _
    // Predicated region
    $region34: #{tpu_custom_call.1} parent=1 // pred_check
      _
    $region35: #{tpu_custom_call.1} parent=1 // pred_check_branch
      %2971 = sbr.rel (0) target = $region37
    $region36: #{tpu_custom_call.1} parent=1 // pred_region
      %2972 = dma.done [#allocation3], 448
    $region37: #{tpu_custom_call.1} parent=1 // pred_fallthru
      _
    %2973 = vsyncpa [#allocation3], 1

</llo_original>
